<compile_context>
chip_gen: v6e
topology: v6e:2x2x1
jax: 0.10.0
libtpu: 0.0.40
codegen_flags: <defaults>
</compile_context>

<pallas_src>
import math
import functools

import jax
import jax.numpy as jnp
from jax import lax
from jax.experimental import pallas as pl
from jax.experimental.pallas import tpu as pltpu


NEG_INF = -1e30


# ----------------------------------------------------------------------------
# In-kernel helpers
# ----------------------------------------------------------------------------

def _layer_norm(x, g, b, eps=1e-6):
    # Single-pass statistics (sum + sum-of-squares) -> one cross-lane pass.
    n = x.shape[-1]
    inv_n = 1.0 / n
    s = jnp.sum(x, axis=-1, keepdims=True)
    ss = jnp.sum(x * x, axis=-1, keepdims=True)
    m = s * inv_n
    var = jnp.maximum(ss * inv_n - m * m, 0.0)
    return (x - m) * lax.rsqrt(var + eps) * g + b


# ----------------------------------------------------------------------------
# Fused per-layer kernel
# ----------------------------------------------------------------------------

def encoder_layer_kernel(x_ref, bias_ref,
                         ln1_g_ref, ln1_b_ref,
                         wqkv_ref, bqkv_ref,
                         wo_ref, bo_ref,
                         ln2_g_ref, ln2_b_ref,
                         w1_ref, b1_ref, w2_ref, b2_ref,
                         lnf_g_ref, lnf_b_ref,
                         o_ref,
                         q_s, k_s, v_s,
                         *, num_heads, apply_final_ln):
    f32 = jnp.float32
    bf16 = jnp.bfloat16
    nh = num_heads
    _, TQ, H = o_ref.shape
    S = k_s.shape[0]
    d = H // nh
    i = pl.program_id(1)

    ln1_g = ln1_g_ref[...].astype(f32)
    ln1_b = ln1_b_ref[...].astype(f32)

    # --- QKV projection: once per batch row, into persistent VMEM scratch ----
    @pl.when(i == 0)
    def _():
        x_all = x_ref[0].astype(f32)                              # [S, H]
        xn = _layer_norm(x_all, ln1_g, ln1_b)
        # Fused [H, 3H] projection (Wq pre-scaled by 1/sqrt(d) host-side).
        qkv = (jnp.dot(xn.astype(bf16), wqkv_ref[...],
                       preferred_element_type=f32)
               + bqkv_ref[...].astype(f32))                       # [S, 3H] f32
        q_s[...] = qkv[:, :H].astype(bf16)
        k_s[...] = qkv[:, H:2 * H].astype(bf16)
        v_s[...] = qkv[:, 2 * H:].astype(bf16)

    row0 = pl.multiple_of(i * TQ, TQ)
    x_q = x_ref[0, pl.ds(row0, TQ), :].astype(f32)                # residual rows
    bias = bias_ref[0].astype(f32)                                # [1, S]

    # --- self-attention (heads split with one reshape + one transpose) -------
    q3 = jnp.transpose(q_s[pl.ds(row0, TQ), :].reshape(TQ, nh, d), (1, 0, 2))
    k3 = jnp.transpose(k_s[...].reshape(S, nh, d), (1, 0, 2))     # [nh, S, d]
    v3 = jnp.transpose(v_s[...].reshape(S, nh, d), (1, 0, 2))     # [nh, S, d]

    scores = jnp.einsum('hqd,hkd->hqk', q3, k3,
                        preferred_element_type=f32)               # [nh, TQ, S]
    scores = scores + bias[None, :, :]                            # additive mask
    m = jnp.max(scores, axis=-1, keepdims=True)
    p = jnp.exp(scores - m)
    l = jnp.sum(p, axis=-1, keepdims=True)
    ctx = jnp.einsum('hqk,hkd->hqd', p.astype(bf16), v3,
                     preferred_element_type=f32)                  # [nh, TQ, d]
    # Deferred normalization: scale the small [nh,TQ,d] tensor, not p.
    ctx = ctx * pl.reciprocal(l, approx=True)

    # Re-assemble heads and do ONE full-H output projection on the MXU.
    ctx2 = jnp.transpose(ctx, (1, 0, 2)).reshape(TQ, H)           # [TQ, H]
    att = (jnp.dot(ctx2.astype(bf16), wo_ref[...],
                   preferred_element_type=f32)
           + bo_ref[...].astype(f32))
    h = att + x_q                                                 # dropout == id

    # --- position-wise feed-forward (pre-LN) ----------------------------------
    hn = _layer_norm(h, ln2_g_ref[...].astype(f32), ln2_b_ref[...].astype(f32))
    ff = (jnp.dot(hn.astype(bf16), w1_ref[...], preferred_element_type=f32)
          + b1_ref[...].astype(f32))
    ff = jnp.maximum(ff, 0.0)
    ff = (jnp.dot(ff.astype(bf16), w2_ref[...], preferred_element_type=f32)
          + b2_ref[...].astype(f32))
    y = ff + h

    if apply_final_ln:   # static flag: final encoder LN fused into last layer
        y = _layer_norm(y, lnf_g_ref[...].astype(f32), lnf_b_ref[...].astype(f32))

    o_ref[0] = y.astype(o_ref.dtype)


# ----------------------------------------------------------------------------
# Host-side wrappers
# ----------------------------------------------------------------------------

def positional_encoding(seq_len, size):
    pos = jnp.arange(seq_len, dtype=jnp.float32)[:, None]
    div = jnp.exp(jnp.arange(0, size, 2, dtype=jnp.float32)
                  * -(math.log(10000.0) / size))
    pe = jnp.zeros((seq_len, size), jnp.float32)
    pe = pe.at[:, 0::2].set(jnp.sin(pos * div))
    pe = pe.at[:, 1::2].set(jnp.cos(pos * div))
    return pe


def prepare_layer_params(p, num_heads):
    """Fuse / pre-transform per-layer weights (once, outside the kernel).

    Weights go to bf16 (MXU inputs, half DMA/VMEM); biases / LN params stay f32.
    Wq & bq are pre-scaled by 1/sqrt(head_dim); Q/K/V fused into one [H,3H]."""
    H = p["wq"].shape[0]
    d = H // num_heads
    scale = 1.0 / math.sqrt(d)
    bf16 = jnp.bfloat16
    return dict(
        ln1_g=p["ln1_g"], ln1_b=p["ln1_b"],
        wqkv=jnp.concatenate([p["wq"] * scale, p["wk"], p["wv"]],
                             axis=1).astype(bf16),               # [H, 3H]
        bqkv=jnp.concatenate([p["bq"] * scale, p["bk"], p["bv"]], axis=1),
        wo=p["wo"].astype(bf16), bo=p["bo"],                     # [H, H]
        ln2_g=p["ln2_g"], ln2_b=p["ln2_b"],
        w1=p["w1"].astype(bf16), b1=p["b1"],
        w2=p["w2"].astype(bf16), b2=p["b2"],
    )


def _pick_q_tile(S, nh, budget_bytes=16 << 20):
    # scores + p cost ~ 2 * nh * TQ * S * 4 bytes in f32.
    if 2 * nh * S * S * 4 <= budget_bytes:
        return S
    for t in (1024, 512, 256, 128, 64, 32, 16, 8):
        if S % t == 0 and 2 * nh * t * S * 4 <= budget_bytes:
            return t
    return S


def _vmem_limit_bytes(S, H, F, nh, TQ):
    f32b, bf16b = 4, 2
    weights = (3 * H * H + H * H + H * F + F * H) * bf16b \
              + (3 * H + F + 8 * H) * f32b
    io = 2 * (S * H * f32b) + 2 * (TQ * H * f32b) + 2 * (S * f32b)
    scratch = 3 * S * H * bf16b
    attn = 2 * nh * TQ * S * f32b + 2 * nh * TQ * (H // nh) * f32b
    ffn = 2 * TQ * F * f32b
    est = int(1.5 * (weights + io + scratch + attn + ffn))
    # Keep within the smallest physical VMEM across generations (v7x: 64 MiB).
    return max(32 << 20, min(64 << 20, est))


def _weight_spec(shape):
    # Constant index_map -> block never re-fetched -> single-buffer it.
    idx = lambda b, i: (0,) * len(shape)
    try:
        return pl.BlockSpec(shape, idx, pipeline_mode=pl.Buffered(1))
    except TypeError:  # older jax without pipeline_mode kwarg
        return pl.BlockSpec(shape, idx)


def run_encoder_layer(x, mask_bias, p, num_heads, lnf_g, lnf_b, apply_final_ln):
    B, S, H = x.shape
    F = p["w1"].shape[1]
    TQ = _pick_q_tile(S, num_heads)
    n_q = S // TQ

    in_specs = [
        pl.BlockSpec((1, S, H), lambda b, i: (b, 0, 0)),   # full seq (KV + resid)
        pl.BlockSpec((1, 1, S), lambda b, i: (b, 0, 0)),   # additive key-mask bias
        _weight_spec((1, H)), _weight_spec((1, H)),        # ln1 gamma/beta
        _weight_spec((H, 3 * H)), _weight_spec((1, 3 * H)),  # fused Wqkv, bqkv
        _weight_spec((H, H)), _weight_spec((1, H)),        # Wo, bo
        _weight_spec((1, H)), _weight_spec((1, H)),        # ln2 gamma/beta
        _weight_spec((H, F)), _weight_spec((1, F)),        # W1, b1
        _weight_spec((F, H)), _weight_spec((1, H)),        # W2, b2
        _weight_spec((1, H)), _weight_spec((1, H)),        # final LN gamma/beta
    ]

    kernel = functools.partial(encoder_layer_kernel,
                               num_heads=num_heads,
                               apply_final_ln=apply_final_ln)

    # Query-tile axis must be "arbitrary": the QKV scratch written at i==0 is
    # consumed by later i on the same core. Batch axis is megacore-parallel.
    return pl.pallas_call(
        kernel,
        out_shape=jax.ShapeDtypeStruct((B, S, H), x.dtype),
        grid=(B, n_q),
        in_specs=in_specs,
        out_specs=pl.BlockSpec((1, TQ, H), lambda b, i: (b, i, 0)),
        scratch_shapes=[
            pltpu.VMEM((S, H), jnp.bfloat16),   # Q (pre-scaled) per batch row
            pltpu.VMEM((S, H), jnp.bfloat16),   # K
            pltpu.VMEM((S, H), jnp.bfloat16),   # V
        ],
        compiler_params=pltpu.CompilerParams(
            dimension_semantics=("parallel", "arbitrary"),
            vmem_limit_bytes=_vmem_limit_bytes(S, H, F, num_heads, TQ)),
    )(x, mask_bias,
      p["ln1_g"], p["ln1_b"], p["wqkv"], p["bqkv"],
      p["wo"], p["bo"], p["ln2_g"], p["ln2_b"],
      p["w1"], p["b1"], p["w2"], p["b2"],
      lnf_g, lnf_b)


def encoder_forward(embed_src, src_length, mask, params, num_heads):
    # src_length mirrors the PyTorch signature but is unused in the reference
    # forward (mask already encodes the valid positions).
    del src_length
    B, S, H = embed_src.shape
    num_layers = len(params["layers"])
    assert num_layers >= 1

    # PE add in the prologue (one XLA add); emb_dropout is identity in eval.
    pe = positional_encoding(S, H).astype(embed_src.dtype)
    x = embed_src + pe[None, :, :]

    # Additive key mask computed once for all layers (0 keep, -1e30 drop).
    mask_bias = jnp.where(mask > 0, 0.0, NEG_INF).astype(jnp.float32)

    for li, layer_params in enumerate(params["layers"]):
        fused = prepare_layer_params(layer_params, num_heads)
        x = run_encoder_layer(x, mask_bias, fused, num_heads,
                              params["ln_g"], params["ln_b"],
                              apply_final_ln=(li == num_layers - 1))
    return x


# ----------------------------------------------------------------------------
# Deterministic parameter init
# ----------------------------------------------------------------------------

def init_params(key, H, F, num_layers):
    def lin(k, fan_in, shape):
        return jax.random.normal(k, shape, jnp.float32) / math.sqrt(fan_in)

    layers = []
    for _ in range(num_layers):
        key, k0, k1, k2, k3, k4, k5 = jax.random.split(key, 7)
        layers.append(dict(
            ln1_g=jnp.ones((1, H), jnp.float32), ln1_b=jnp.zeros((1, H), jnp.float32),
            wq=lin(k0, H, (H, H)), bq=jnp.zeros((1, H), jnp.float32),
            wk=lin(k1, H, (H, H)), bk=jnp.zeros((1, H), jnp.float32),
            wv=lin(k2, H, (H, H)), bv=jnp.zeros((1, H), jnp.float32),
            wo=lin(k3, H, (H, H)), bo=jnp.zeros((1, H), jnp.float32),
            ln2_g=jnp.ones((1, H), jnp.float32), ln2_b=jnp.zeros((1, H), jnp.float32),
            w1=lin(k4, H, (H, F)), b1=jnp.zeros((1, F), jnp.float32),
            w2=lin(k5, F, (F, H)), b2=jnp.zeros((1, H), jnp.float32),
        ))
    return dict(layers=layers,
                ln_g=jnp.ones((1, H), jnp.float32),
                ln_b=jnp.zeros((1, H), jnp.float32))


# ----------------------------------------------------------------------------
# Main
# ----------------------------------------------------------------------------

if __name__ == "__main__":
    B, S, H, F, NUM_LAYERS, NUM_HEADS = 2, 8, 32, 64, 2, 4

    key = jax.random.PRNGKey(0)
    k_x, k_p = jax.random.split(key)

    embed_src = jax.random.normal(k_x, (B, S, H), jnp.float32)   # [B, S, H]
    src_length = jnp.array([S, S - 2], jnp.int32)                # [B]
    mask = (jnp.arange(S)[None, None, :] <
            src_length[:, None, None]).astype(jnp.float32)       # [B, 1, S]

    params = init_params(k_p, H, F, NUM_LAYERS)

    out = encoder_forward(embed_src, src_length, mask, params, NUM_HEADS)
    out = jax.block_until_ready(out)
    assert out.shape == (B, S, H)
    print("KERNEL_OK")
</pallas_src>

<mosaic_0001>
module attributes {stable_mosaic.version = 11 : i64} {
  func.func @encoder_layer_kernel(%arg0: i32, %arg1: i32, %arg2: memref<1x8x32xf32, #tpu.memory_space<vmem>>, %arg3: memref<1x1x8xf32, #tpu.memory_space<vmem>>, %arg4: memref<1x32xf32, #tpu.memory_space<vmem>>, %arg5: memref<1x32xf32, #tpu.memory_space<vmem>>, %arg6: memref<32x96xbf16, #tpu.memory_space<vmem>>, %arg7: memref<1x96xf32, #tpu.memory_space<vmem>>, %arg8: memref<32x32xbf16, #tpu.memory_space<vmem>>, %arg9: memref<1x32xf32, #tpu.memory_space<vmem>>, %arg10: memref<1x32xf32, #tpu.memory_space<vmem>>, %arg11: memref<1x32xf32, #tpu.memory_space<vmem>>, %arg12: memref<32x64xbf16, #tpu.memory_space<vmem>>, %arg13: memref<1x64xf32, #tpu.memory_space<vmem>>, %arg14: memref<64x32xbf16, #tpu.memory_space<vmem>>, %arg15: memref<1x32xf32, #tpu.memory_space<vmem>>, %arg16: memref<1x32xf32, #tpu.memory_space<vmem>>, %arg17: memref<1x32xf32, #tpu.memory_space<vmem>>, %arg18: memref<1x8x32xf32, #tpu.memory_space<vmem>>, %arg19: memref<8x32xbf16, #tpu.memory_space<vmem>>, %arg20: memref<8x32xbf16, #tpu.memory_space<vmem>>, %arg21: memref<8x32xbf16, #tpu.memory_space<vmem>>) attributes {dimension_semantics = [#tpu.dimension_semantics<parallel>, #tpu.dimension_semantics<arbitrary>], iteration_bounds = array<i64: 2, 1>, scalar_prefetch = 0 : i64, scratch_operands = 3 : i64, tpu.core_type = #tpu.core_type<tc>, window_params = [{transform_indices = @transform_0, window_bounds = array<i64: 1, 8, 32>}, {transform_indices = @transform_1, window_bounds = array<i64: 1, 1, 8>}, {pipeline_mode = #tpu.pipeline_mode<synchronous>, transform_indices = @transform_2, window_bounds = array<i64: 1, 32>}, {pipeline_mode = #tpu.pipeline_mode<synchronous>, transform_indices = @transform_3, window_bounds = array<i64: 1, 32>}, {pipeline_mode = #tpu.pipeline_mode<synchronous>, transform_indices = @transform_4, window_bounds = array<i64: 32, 96>}, {pipeline_mode = #tpu.pipeline_mode<synchronous>, transform_indices = @transform_5, window_bounds = array<i64: 1, 96>}, {pipeline_mode = #tpu.pipeline_mode<synchronous>, transform_indices = @transform_6, window_bounds = array<i64: 32, 32>}, {pipeline_mode = #tpu.pipeline_mode<synchronous>, transform_indices = @transform_7, window_bounds = array<i64: 1, 32>}, {pipeline_mode = #tpu.pipeline_mode<synchronous>, transform_indices = @transform_8, window_bounds = array<i64: 1, 32>}, {pipeline_mode = #tpu.pipeline_mode<synchronous>, transform_indices = @transform_9, window_bounds = array<i64: 1, 32>}, {pipeline_mode = #tpu.pipeline_mode<synchronous>, transform_indices = @transform_10, window_bounds = array<i64: 32, 64>}, {pipeline_mode = #tpu.pipeline_mode<synchronous>, transform_indices = @transform_11, window_bounds = array<i64: 1, 64>}, {pipeline_mode = #tpu.pipeline_mode<synchronous>, transform_indices = @transform_12, window_bounds = array<i64: 64, 32>}, {pipeline_mode = #tpu.pipeline_mode<synchronous>, transform_indices = @transform_13, window_bounds = array<i64: 1, 32>}, {pipeline_mode = #tpu.pipeline_mode<synchronous>, transform_indices = @transform_14, window_bounds = array<i64: 1, 32>}, {pipeline_mode = #tpu.pipeline_mode<synchronous>, transform_indices = @transform_15, window_bounds = array<i64: 1, 32>}, {transform_indices = @transform_16, window_bounds = array<i64: 1, 8, 32>}]} {
    %c0 = arith.constant 0 : index
    %c0_0 = arith.constant 0 : index
    %0 = vector.load %arg4[%c0, %c0_0] : memref<1x32xf32, #tpu.memory_space<vmem>>, vector<1x32xf32>
    %c0_1 = arith.constant 0 : index
    %c0_2 = arith.constant 0 : index
    %1 = vector.load %arg5[%c0_1, %c0_2] : memref<1x32xf32, #tpu.memory_space<vmem>>, vector<1x32xf32>
    %c0_i32 = arith.constant 0 : i32
    %2 = arith.cmpi eq, %arg1, %c0_i32 : i32
    %3 = arith.extui %2 : i1 to i32
    %c0_i32_3 = arith.constant 0 : i32
    %4 = arith.cmpi ne, %3, %c0_i32_3 : i32
    scf.if %4 {
      %c0_46 = arith.constant 0 : index
      %c0_47 = arith.constant 0 : index
      %c0_48 = arith.constant 0 : index
      %91 = vector.load %arg2[%c0_46, %c0_47, %c0_48] : memref<1x8x32xf32, #tpu.memory_space<vmem>>, vector<1x8x32xf32>
      %92 = vector.shape_cast %91 : vector<1x8x32xf32> to vector<8x32xf32>
      %cst_49 = arith.constant dense<0.000000e+00> : vector<8xf32>
      %93 = vector.multi_reduction <add>, %92, %cst_49 [1] : vector<8x32xf32> to vector<8xf32>
      %94 = vector.shape_cast %93 : vector<8xf32> to vector<8x1xf32>
      %95 = arith.mulf %92, %92 : vector<8x32xf32>
      %cst_50 = arith.constant dense<0.000000e+00> : vector<8xf32>
      %96 = vector.multi_reduction <add>, %95, %cst_50 [1] : vector<8x32xf32> to vector<8xf32>
      %97 = vector.shape_cast %96 : vector<8xf32> to vector<8x1xf32>
      %cst_51 = arith.constant 3.125000e-02 : f32
      %98 = vector.broadcast %cst_51 : f32 to vector<8x1xf32>
      %99 = arith.mulf %94, %98 : vector<8x1xf32>
      %cst_52 = arith.constant 3.125000e-02 : f32
      %100 = vector.broadcast %cst_52 : f32 to vector<8x1xf32>
      %101 = arith.mulf %97, %100 : vector<8x1xf32>
      %102 = arith.mulf %99, %99 : vector<8x1xf32>
      %103 = arith.subf %101, %102 : vector<8x1xf32>
      %cst_53 = arith.constant 0.000000e+00 : f32
      %104 = vector.broadcast %cst_53 : f32 to vector<8x1xf32>
      %105 = arith.maximumf %103, %104 : vector<8x1xf32>
      %106 = vector.broadcast %99 : vector<8x1xf32> to vector<8x32xf32>
      %107 = arith.subf %92, %106 : vector<8x32xf32>
      %cst_54 = arith.constant 9.99999997E-7 : f32
      %108 = vector.broadcast %cst_54 : f32 to vector<8x1xf32>
      %109 = arith.addf %105, %108 : vector<8x1xf32>
      %110 = math.rsqrt %109 : vector<8x1xf32>
      %111 = vector.broadcast %110 : vector<8x1xf32> to vector<8x32xf32>
      %112 = arith.mulf %107, %111 : vector<8x32xf32>
      %113 = vector.broadcast %0 : vector<1x32xf32> to vector<8x32xf32>
      %114 = arith.mulf %112, %113 : vector<8x32xf32>
      %115 = vector.broadcast %1 : vector<1x32xf32> to vector<8x32xf32>
      %116 = arith.addf %114, %115 : vector<8x32xf32>
      %117 = arith.truncf %116 : vector<8x32xf32> to vector<8x32xbf16>
      %c0_55 = arith.constant 0 : index
      %c0_56 = arith.constant 0 : index
      %118 = vector.load %arg6[%c0_55, %c0_56] : memref<32x96xbf16, #tpu.memory_space<vmem>>, vector<32x96xbf16>
      %cst_57 = arith.constant dense<0.000000e+00> : vector<8x96xf32>
      %119 = tpu.matmul %117, %118, %cst_57 {dimension_numbers = #tpu.dot_dimension_numbers<[1], [0], [0], [1], [0, 0, 1, 1], [], []>} : vector<8x32xbf16>, vector<32x96xbf16>, vector<8x96xf32> -> vector<8x96xf32>
      %c0_58 = arith.constant 0 : index
      %c0_59 = arith.constant 0 : index
      %120 = vector.load %arg7[%c0_58, %c0_59] : memref<1x96xf32, #tpu.memory_space<vmem>>, vector<1x96xf32>
      %121 = vector.broadcast %120 : vector<1x96xf32> to vector<8x96xf32>
      %122 = arith.addf %119, %121 : vector<8x96xf32>
      %123 = vector.extract_strided_slice %122 {offsets = [0, 0], sizes = [8, 32], strides = [1, 1]} : vector<8x96xf32> to vector<8x32xf32>
      %124 = arith.truncf %123 : vector<8x32xf32> to vector<8x32xbf16>
      %c0_60 = arith.constant 0 : index
      %c0_61 = arith.constant 0 : index
      %125 = vector.load %arg19[%c0_60, %c0_61] : memref<8x32xbf16, #tpu.memory_space<vmem>>, vector<8x32xbf16>
      tpu.vector_store %arg19[%c0_60, %c0_61], %124 {strides = array<i32>} : memref<8x32xbf16, #tpu.memory_space<vmem>>, vector<8x32xbf16>,
      %126 = vector.extract_strided_slice %122 {offsets = [0, 32], sizes = [8, 32], strides = [1, 1]} : vector<8x96xf32> to vector<8x32xf32>
      %127 = arith.truncf %126 : vector<8x32xf32> to vector<8x32xbf16>
      %c0_62 = arith.constant 0 : index
      %c0_63 = arith.constant 0 : index
      %128 = vector.load %arg20[%c0_62, %c0_63] : memref<8x32xbf16, #tpu.memory_space<vmem>>, vector<8x32xbf16>
      tpu.vector_store %arg20[%c0_62, %c0_63], %127 {strides = array<i32>} : memref<8x32xbf16, #tpu.memory_space<vmem>>, vector<8x32xbf16>,
      %129 = vector.extract_strided_slice %122 {offsets = [0, 64], sizes = [8, 32], strides = [1, 1]} : vector<8x96xf32> to vector<8x32xf32>
      %130 = arith.truncf %129 : vector<8x32xf32> to vector<8x32xbf16>
      %c0_64 = arith.constant 0 : index
      %c0_65 = arith.constant 0 : index
      %131 = vector.load %arg21[%c0_64, %c0_65] : memref<8x32xbf16, #tpu.memory_space<vmem>>, vector<8x32xbf16>
      tpu.vector_store %arg21[%c0_64, %c0_65], %130 {strides = array<i32>} : memref<8x32xbf16, #tpu.memory_space<vmem>>, vector<8x32xbf16>,
    } else {
    }
    %c8_i32 = arith.constant 8 : i32
    %5 = arith.muli %arg1, %c8_i32 : i32
    %6 = tpu.assume_multiple %5, 8 : i32
    %c0_4 = arith.constant 0 : index
    %7 = arith.index_cast %6 : i32 to index
    %c0_5 = arith.constant 0 : index
    %8 = vector.load %arg2[%c0_4, %7, %c0_5] : memref<1x8x32xf32, #tpu.memory_space<vmem>>, vector<1x8x32xf32>
    %9 = vector.shape_cast %8 : vector<1x8x32xf32> to vector<8x32xf32>
    %c0_6 = arith.constant 0 : index
    %c0_7 = arith.constant 0 : index
    %c0_8 = arith.constant 0 : index
    %10 = vector.load %arg3[%c0_6, %c0_7, %c0_8] : memref<1x1x8xf32, #tpu.memory_space<vmem>>, vector<1x1x8xf32>
    %11 = vector.shape_cast %10 : vector<1x1x8xf32> to vector<1x8xf32>
    %12 = arith.index_cast %6 : i32 to index
    %c0_9 = arith.constant 0 : index
    %13 = vector.load %arg19[%12, %c0_9] : memref<8x32xbf16, #tpu.memory_space<vmem>>, vector<8x32xbf16>
    %14 = vector.shape_cast %13 : vector<8x32xbf16> to vector<8x4x8xbf16>
    %15 = tpu.transpose %14, [1, 0, 2] : vector<8x4x8xbf16> -> vector<4x8x8xbf16>
    %c0_10 = arith.constant 0 : index
    %c0_11 = arith.constant 0 : index
    %16 = vector.load %arg20[%c0_10, %c0_11] : memref<8x32xbf16, #tpu.memory_space<vmem>>, vector<8x32xbf16>
    %17 = vector.shape_cast %16 : vector<8x32xbf16> to vector<8x4x8xbf16>
    %18 = tpu.transpose %17, [1, 0, 2] : vector<8x4x8xbf16> -> vector<4x8x8xbf16>
    %c0_12 = arith.constant 0 : index
    %c0_13 = arith.constant 0 : index
    %19 = vector.load %arg21[%c0_12, %c0_13] : memref<8x32xbf16, #tpu.memory_space<vmem>>, vector<8x32xbf16>
    %20 = vector.shape_cast %19 : vector<8x32xbf16> to vector<8x4x8xbf16>
    %21 = tpu.transpose %20, [1, 0, 2] : vector<8x4x8xbf16> -> vector<4x8x8xbf16>
    "tpu.trace_start"() <{level = 10 : i32, message = "hqd,hkd->hqk"}> : () -> ()
    %cst = arith.constant dense<0.000000e+00> : vector<4x8x8xf32>
    %22 = tpu.matmul %15, %18, %cst {dimension_numbers = #tpu.dot_dimension_numbers<[2], [2], [1], [1], [0, 0, 0, 1, 1, 1], [0], [0]>} : vector<4x8x8xbf16>, vector<4x8x8xbf16>, vector<4x8x8xf32> -> vector<4x8x8xf32>
    "tpu.trace_stop"() : () -> ()
    %23 = vector.shape_cast %11 : vector<1x8xf32> to vector<1x1x8xf32>
    %24 = vector.broadcast %23 : vector<1x1x8xf32> to vector<4x8x8xf32>
    %25 = arith.addf %22, %24 : vector<4x8x8xf32>
    %cst_14 = arith.constant dense<0xFF800000> : vector<4x8xf32>
    %26 = vector.multi_reduction <maximumf>, %25, %cst_14 [2] : vector<4x8x8xf32> to vector<4x8xf32>
    %27 = vector.shape_cast %26 : vector<4x8xf32> to vector<4x8x1xf32>
    %28 = vector.broadcast %27 : vector<4x8x1xf32> to vector<4x8x8xf32>
    %29 = arith.subf %25, %28 : vector<4x8x8xf32>
    %30 = math.exp %29 : vector<4x8x8xf32>
    %cst_15 = arith.constant dense<0.000000e+00> : vector<4x8xf32>
    %31 = vector.multi_reduction <add>, %30, %cst_15 [2] : vector<4x8x8xf32> to vector<4x8xf32>
    %32 = vector.shape_cast %31 : vector<4x8xf32> to vector<4x8x1xf32>
    %33 = arith.truncf %30 : vector<4x8x8xf32> to vector<4x8x8xbf16>
    "tpu.trace_start"() <{level = 10 : i32, message = "hqk,hkd->hqd"}> : () -> ()
    %cst_16 = arith.constant dense<0.000000e+00> : vector<4x8x8xf32>
    %34 = tpu.matmul %33, %21, %cst_16 {dimension_numbers = #tpu.dot_dimension_numbers<[2], [1], [1], [2], [0, 0, 0, 1, 1, 2], [0], [0]>} : vector<4x8x8xbf16>, vector<4x8x8xbf16>, vector<4x8x8xf32> -> vector<4x8x8xf32>
    "tpu.trace_stop"() : () -> ()
    %35 = tpu.reciprocal %32 {approx = true} : vector<4x8x1xf32> -> vector<4x8x1xf32>
    %36 = vector.broadcast %35 : vector<4x8x1xf32> to vector<4x8x8xf32>
    %37 = arith.mulf %34, %36 : vector<4x8x8xf32>
    %38 = tpu.transpose %37, [1, 0, 2] : vector<4x8x8xf32> -> vector<8x4x8xf32>
    %39 = vector.shape_cast %38 : vector<8x4x8xf32> to vector<8x32xf32>
    %40 = arith.truncf %39 : vector<8x32xf32> to vector<8x32xbf16>
    %c0_17 = arith.constant 0 : index
    %c0_18 = arith.constant 0 : index
    %41 = vector.load %arg8[%c0_17, %c0_18] : memref<32x32xbf16, #tpu.memory_space<vmem>>, vector<32x32xbf16>
    %cst_19 = arith.constant dense<0.000000e+00> : vector<8x32xf32>
    %42 = tpu.matmul %40, %41, %cst_19 {dimension_numbers = #tpu.dot_dimension_numbers<[1], [0], [0], [1], [0, 0, 1, 1], [], []>} : vector<8x32xbf16>, vector<32x32xbf16>, vector<8x32xf32> -> vector<8x32xf32>
    %c0_20 = arith.constant 0 : index
    %c0_21 = arith.constant 0 : index
    %43 = vector.load %arg9[%c0_20, %c0_21] : memref<1x32xf32, #tpu.memory_space<vmem>>, vector<1x32xf32>
    %44 = vector.broadcast %43 : vector<1x32xf32> to vector<8x32xf32>
    %45 = arith.addf %42, %44 : vector<8x32xf32>
    %46 = arith.addf %45, %9 : vector<8x32xf32>
    %c0_22 = arith.constant 0 : index
    %c0_23 = arith.constant 0 : index
    %47 = vector.load %arg10[%c0_22, %c0_23] : memref<1x32xf32, #tpu.memory_space<vmem>>, vector<1x32xf32>
    %c0_24 = arith.constant 0 : index
    %c0_25 = arith.constant 0 : index
    %48 = vector.load %arg11[%c0_24, %c0_25] : memref<1x32xf32, #tpu.memory_space<vmem>>, vector<1x32xf32>
    %cst_26 = arith.constant dense<0.000000e+00> : vector<8xf32>
    %49 = vector.multi_reduction <add>, %46, %cst_26 [1] : vector<8x32xf32> to vector<8xf32>
    %50 = vector.shape_cast %49 : vector<8xf32> to vector<8x1xf32>
    %51 = arith.mulf %46, %46 : vector<8x32xf32>
    %cst_27 = arith.constant dense<0.000000e+00> : vector<8xf32>
    %52 = vector.multi_reduction <add>, %51, %cst_27 [1] : vector<8x32xf32> to vector<8xf32>
    %53 = vector.shape_cast %52 : vector<8xf32> to vector<8x1xf32>
    %cst_28 = arith.constant 3.125000e-02 : f32
    %54 = vector.broadcast %cst_28 : f32 to vector<8x1xf32>
    %55 = arith.mulf %50, %54 : vector<8x1xf32>
    %cst_29 = arith.constant 3.125000e-02 : f32
    %56 = vector.broadcast %cst_29 : f32 to vector<8x1xf32>
    %57 = arith.mulf %53, %56 : vector<8x1xf32>
    %58 = arith.mulf %55, %55 : vector<8x1xf32>
    %59 = arith.subf %57, %58 : vector<8x1xf32>
    %cst_30 = arith.constant 0.000000e+00 : f32
    %60 = vector.broadcast %cst_30 : f32 to vector<8x1xf32>
    %61 = arith.maximumf %59, %60 : vector<8x1xf32>
    %62 = vector.broadcast %55 : vector<8x1xf32> to vector<8x32xf32>
    %63 = arith.subf %46, %62 : vector<8x32xf32>
    %cst_31 = arith.constant 9.99999997E-7 : f32
    %64 = vector.broadcast %cst_31 : f32 to vector<8x1xf32>
    %65 = arith.addf %61, %64 : vector<8x1xf32>
    %66 = math.rsqrt %65 : vector<8x1xf32>
    %67 = vector.broadcast %66 : vector<8x1xf32> to vector<8x32xf32>
    %68 = arith.mulf %63, %67 : vector<8x32xf32>
    %69 = vector.broadcast %47 : vector<1x32xf32> to vector<8x32xf32>
    %70 = arith.mulf %68, %69 : vector<8x32xf32>
    %71 = vector.broadcast %48 : vector<1x32xf32> to vector<8x32xf32>
    %72 = arith.addf %70, %71 : vector<8x32xf32>
    %73 = arith.truncf %72 : vector<8x32xf32> to vector<8x32xbf16>
    %c0_32 = arith.constant 0 : index
    %c0_33 = arith.constant 0 : index
    %74 = vector.load %arg12[%c0_32, %c0_33] : memref<32x64xbf16, #tpu.memory_space<vmem>>, vector<32x64xbf16>
    %cst_34 = arith.constant dense<0.000000e+00> : vector<8x64xf32>
    %75 = tpu.matmul %73, %74, %cst_34 {dimension_numbers = #tpu.dot_dimension_numbers<[1], [0], [0], [1], [0, 0, 1, 1], [], []>} : vector<8x32xbf16>, vector<32x64xbf16>, vector<8x64xf32> -> vector<8x64xf32>
    %c0_35 = arith.constant 0 : index
    %c0_36 = arith.constant 0 : index
    %76 = vector.load %arg13[%c0_35, %c0_36] : memref<1x64xf32, #tpu.memory_space<vmem>>, vector<1x64xf32>
    %77 = vector.broadcast %76 : vector<1x64xf32> to vector<8x64xf32>
    %78 = arith.addf %75, %77 : vector<8x64xf32>
    %cst_37 = arith.constant 0.000000e+00 : f32
    %79 = vector.broadcast %cst_37 : f32 to vector<8x64xf32>
    %80 = arith.maximumf %78, %79 : vector<8x64xf32>
    %81 = arith.truncf %80 : vector<8x64xf32> to vector<8x64xbf16>
    %c0_38 = arith.constant 0 : index
    %c0_39 = arith.constant 0 : index
    %82 = vector.load %arg14[%c0_38, %c0_39] : memref<64x32xbf16, #tpu.memory_space<vmem>>, vector<64x32xbf16>
    %cst_40 = arith.constant dense<0.000000e+00> : vector<8x32xf32>
    %83 = tpu.matmul %81, %82, %cst_40 {dimension_numbers = #tpu.dot_dimension_numbers<[1], [0], [0], [1], [0, 0, 1, 1], [], []>} : vector<8x64xbf16>, vector<64x32xbf16>, vector<8x32xf32> -> vector<8x32xf32>
    %c0_41 = arith.constant 0 : index
    %c0_42 = arith.constant 0 : index
    %84 = vector.load %arg15[%c0_41, %c0_42] : memref<1x32xf32, #tpu.memory_space<vmem>>, vector<1x32xf32>
    %85 = vector.broadcast %84 : vector<1x32xf32> to vector<8x32xf32>
    %86 = arith.addf %83, %85 : vector<8x32xf32>
    %87 = arith.addf %86, %46 : vector<8x32xf32>
    %c0_43 = arith.constant 0 : index
    %c0_44 = arith.constant 0 : index
    %c0_45 = arith.constant 0 : index
    %88 = vector.load %arg18[%c0_43, %c0_44, %c0_45] : memref<1x8x32xf32, #tpu.memory_space<vmem>>, vector<1x8x32xf32>
    %89 = vector.shape_cast %88 : vector<1x8x32xf32> to vector<8x32xf32>
    %90 = vector.shape_cast %87 : vector<8x32xf32> to vector<1x8x32xf32>
    tpu.vector_store %arg18[%c0_43, %c0_44, %c0_45], %90 {strides = array<i32>} : memref<1x8x32xf32, #tpu.memory_space<vmem>>, vector<1x8x32xf32>,
    return
  }
  func.func @transform_0(%arg0: i32, %arg1: i32) -> (i32, i32, i32) {
    %c0_i32 = arith.constant 0 : i32
    %c0_i32_0 = arith.constant 0 : i32
    %c0_i32_1 = arith.constant 0 : i32
    return %arg0, %c0_i32, %c0_i32_0 : i32, i32, i32
  }
  func.func @transform_1(%arg0: i32, %arg1: i32) -> (i32, i32, i32) {
    %c0_i32 = arith.constant 0 : i32
    %c0_i32_0 = arith.constant 0 : i32
    %c0_i32_1 = arith.constant 0 : i32
    return %arg0, %c0_i32, %c0_i32_0 : i32, i32, i32
  }
  func.func @transform_2(%arg0: i32, %arg1: i32) -> (i32, i32) {
    %c0_i32 = arith.constant 0 : i32
    %c0_i32_0 = arith.constant 0 : i32
    %c0_i32_1 = arith.constant 0 : i32
    return %c0_i32, %c0_i32_0 : i32, i32
  }
  func.func @transform_3(%arg0: i32, %arg1: i32) -> (i32, i32) {
    %c0_i32 = arith.constant 0 : i32
    %c0_i32_0 = arith.constant 0 : i32
    %c0_i32_1 = arith.constant 0 : i32
    return %c0_i32, %c0_i32_0 : i32, i32
  }
  func.func @transform_4(%arg0: i32, %arg1: i32) -> (i32, i32) {
    %c0_i32 = arith.constant 0 : i32
    %c0_i32_0 = arith.constant 0 : i32
    %c0_i32_1 = arith.constant 0 : i32
    return %c0_i32, %c0_i32_0 : i32, i32
  }
  func.func @transform_5(%arg0: i32, %arg1: i32) -> (i32, i32) {
    %c0_i32 = arith.constant 0 : i32
    %c0_i32_0 = arith.constant 0 : i32
    %c0_i32_1 = arith.constant 0 : i32
    return %c0_i32, %c0_i32_0 : i32, i32
  }
  func.func @transform_6(%arg0: i32, %arg1: i32) -> (i32, i32) {
    %c0_i32 = arith.constant 0 : i32
    %c0_i32_0 = arith.constant 0 : i32
    %c0_i32_1 = arith.constant 0 : i32
    return %c0_i32, %c0_i32_0 : i32, i32
  }
  func.func @transform_7(%arg0: i32, %arg1: i32) -> (i32, i32) {
    %c0_i32 = arith.constant 0 : i32
    %c0_i32_0 = arith.constant 0 : i32
    %c0_i32_1 = arith.constant 0 : i32
    return %c0_i32, %c0_i32_0 : i32, i32
  }
  func.func @transform_8(%arg0: i32, %arg1: i32) -> (i32, i32) {
    %c0_i32 = arith.constant 0 : i32
    %c0_i32_0 = arith.constant 0 : i32
    %c0_i32_1 = arith.constant 0 : i32
    return %c0_i32, %c0_i32_0 : i32, i32
  }
  func.func @transform_9(%arg0: i32, %arg1: i32) -> (i32, i32) {
    %c0_i32 = arith.constant 0 : i32
    %c0_i32_0 = arith.constant 0 : i32
    %c0_i32_1 = arith.constant 0 : i32
    return %c0_i32, %c0_i32_0 : i32, i32
  }
  func.func @transform_10(%arg0: i32, %arg1: i32) -> (i32, i32) {
    %c0_i32 = arith.constant 0 : i32
    %c0_i32_0 = arith.constant 0 : i32
    %c0_i32_1 = arith.constant 0 : i32
    return %c0_i32, %c0_i32_0 : i32, i32
  }
  func.func @transform_11(%arg0: i32, %arg1: i32) -> (i32, i32) {
    %c0_i32 = arith.constant 0 : i32
    %c0_i32_0 = arith.constant 0 : i32
    %c0_i32_1 = arith.constant 0 : i32
    return %c0_i32, %c0_i32_0 : i32, i32
  }
  func.func @transform_12(%arg0: i32, %arg1: i32) -> (i32, i32) {
    %c0_i32 = arith.constant 0 : i32
    %c0_i32_0 = arith.constant 0 : i32
    %c0_i32_1 = arith.constant 0 : i32
    return %c0_i32, %c0_i32_0 : i32, i32
  }
  func.func @transform_13(%arg0: i32, %arg1: i32) -> (i32, i32) {
    %c0_i32 = arith.constant 0 : i32
    %c0_i32_0 = arith.constant 0 : i32
    %c0_i32_1 = arith.constant 0 : i32
    return %c0_i32, %c0_i32_0 : i32, i32
  }
  func.func @transform_14(%arg0: i32, %arg1: i32) -> (i32, i32) {
    %c0_i32 = arith.constant 0 : i32
    %c0_i32_0 = arith.constant 0 : i32
    %c0_i32_1 = arith.constant 0 : i32
    return %c0_i32, %c0_i32_0 : i32, i32
  }
  func.func @transform_15(%arg0: i32, %arg1: i32) -> (i32, i32) {
    %c0_i32 = arith.constant 0 : i32
    %c0_i32_0 = arith.constant 0 : i32
    %c0_i32_1 = arith.constant 0 : i32
    return %c0_i32, %c0_i32_0 : i32, i32
  }
  func.func @transform_16(%arg0: i32, %arg1: i32) -> (i32, i32, i32) {
    %c0_i32 = arith.constant 0 : i32
    %c0_i32_0 = arith.constant 0 : i32
    return %arg0, %arg1, %c0_i32 : i32, i32, i32
  }
}

</mosaic_0001>

<llo_original>
// kernel: tpu_custom_call.1
$region0: #{tpu_custom_call.1}
  #allocation0 [shape = 'u32[]', space=smem, size = 0x4, offset = 0x4, fixed_abs, tag = 'smem constant byte address 0x4 - core index']
  #allocation1 [shape = 'u32[144,128]{1,0:T(1,128)}', space=vmem, size = 0x12000, scoped, tag = 'internal scratch']
  #allocation2 [shape = 'bf16[8,32]{1,0:T(8,128)(2,1)}', space=vmem, size = 0x800, scoped, tag = 'scratch operand']
  #allocation3 [shape = 'bf16[8,32]{1,0:T(8,128)(2,1)}', space=vmem, size = 0x800, scoped, tag = 'scratch operand']
  #allocation4 [shape = 'bf16[8,32]{1,0:T(8,128)(2,1)}', space=vmem, size = 0x800, scoped, tag = 'scratch operand']
  %s0 = inlined_call_operand.vmem [shape: f32[2,8,32], index: 0, kind: input, shape index: {}]
  %s1 = inlined_call_operand.hbm [shape: f32[2,1,8], index: 1, kind: input, shape index: {}]
  %s2 = inlined_call_operand.hbm [shape: f32[1,32], index: 2, kind: input, shape index: {}]
  %s3 = inlined_call_operand.hbm [shape: f32[1,32], index: 3, kind: input, shape index: {}]
  %s4 = inlined_call_operand.vmem [shape: bf16[32,96], index: 4, kind: input, shape index: {}]
  %s5 = inlined_call_operand.hbm [shape: f32[1,96], index: 5, kind: input, shape index: {}]
  %s6 = inlined_call_operand.vmem [shape: bf16[32,32], index: 6, kind: input, shape index: {}]
  %s7 = inlined_call_operand.hbm [shape: f32[1,32], index: 7, kind: input, shape index: {}]
  %s8 = inlined_call_operand.hbm [shape: f32[1,32], index: 8, kind: input, shape index: {}]
  %s9 = inlined_call_operand.hbm [shape: f32[1,32], index: 9, kind: input, shape index: {}]
  %s10 = inlined_call_operand.vmem [shape: bf16[32,64], index: 10, kind: input, shape index: {}]
  %s11 = inlined_call_operand.vmem [shape: f32[1,64], index: 11, kind: input, shape index: {}]
  %s12 = inlined_call_operand.vmem [shape: bf16[64,32], index: 12, kind: input, shape index: {}]
  %s13 = inlined_call_operand.vmem [shape: f32[1,32], index: 13, kind: input, shape index: {}]
  %s14 = inlined_call_operand.vmem [shape: f32[1,32], index: 14, kind: input, shape index: {}]
  %s15 = inlined_call_operand.vmem [shape: f32[1,32], index: 15, kind: input, shape index: {}]
  %s16 = inlined_call_operand.hbm [shape: f32[2,8,32], index: 16, kind: output, shape index: {}]
  %s17 = sld [smem:[#allocation0]]
  $region129: #{tpu_custom_call.1} parent=0
    _
  %s19 = ssub.s32 1, %s17
  %s20 = scalar_select 0, %s19, %s17
  $region1: #{tpu_custom_call.1} parent=0
    #allocation5 [shape = 'u8[1024]{0}', space=vmem, size = 0x400, scoped, tag = 'input window, operand 1']
    #allocation6 [shape = 's32[2]{0}', space=sflag, size = 0x8, scoped, tag = 'scoped memory for tpu_custom_call.1']
    #allocation7 [shape = 's32[2]{0}', space=sflag, size = 0x8, scoped, tag = 'scoped memory for tpu_custom_call.1']
    #allocation8 [shape = 'u8[512]{0}', space=vmem, size = 0x400, scoped, tag = 'input window, operand 2, single buffered']
    #allocation9 [shape = 's32[1]{0}', space=sflag, size = 0x4, scoped, tag = 'scoped memory for tpu_custom_call.1']
    #allocation10 [shape = 'u8[512]{0}', space=vmem, size = 0x400, scoped, tag = 'input window, operand 3, single buffered']
    #allocation11 [shape = 'u8[512]{0}', space=vmem, size = 0x400, scoped, tag = 'input window, operand 5, single buffered']
    #allocation12 [shape = 's32[1]{0}', space=sflag, size = 0x4, scoped, tag = 'scoped memory for tpu_custom_call.1']
    #allocation13 [shape = 'u8[512]{0}', space=vmem, size = 0x400, scoped, tag = 'input window, operand 7, single buffered']
    #allocation14 [shape = 'u8[512]{0}', space=vmem, size = 0x400, scoped, tag = 'input window, operand 8, single buffered']
    #allocation15 [shape = 's32[1]{0}', space=sflag, size = 0x4, scoped, tag = 'scoped memory for tpu_custom_call.1']
    #allocation16 [shape = 'u8[512]{0}', space=vmem, size = 0x400, scoped, tag = 'input window, operand 9, single buffered']
    #allocation17 [shape = 'u8[8192]{0}', space=vmem, size = 0x2000, scoped, tag = 'output window, operand 0']
    %21 = vsyncpa [#allocation6], 0
    %s22 = scalar_lea.sflag [#allocation6], 1
    %23 = vsyncpa %s22, 0
    %24 = vsyncpa [#allocation9], 0
    %25 = vsyncpa [#allocation12], 0
    %26 = vsyncpa [#allocation15], 0
    %27 = vsyncpa [#allocation7], 0
    %s28 = scalar_lea.sflag [#allocation7], 1
    %29 = vsyncpa %s28, 0
    loop: start=0, step=1, limit=4
    $region2: #{tpu_custom_call.1} parent=1 // loop_pre_header
      _
    $region3: #{tpu_custom_call.1} parent=1 // loop_header
      %s31 = sphi 0, %s35
      %p32 = scmp.ge.s32.totalorder %s31, 4
      %s38 = sphi 0, %s50
      %s39 = sphi 0, %s46
      %s40 = sphi 0, %s38
      %s41 = sphi 0, %s39
      %s42 = sphi 0, %s40
      %s43 = sphi 0, %s41
      %s53 = sphi 0, %s55
      %s56 = sphi 0, %s53
      %s57 = sphi 0, %s56
      %s73 = sphi 0, %s57
      %s79 = sphi 0, %s81
      %s82 = sphi 0, %s79
      %s83 = sphi 0, %s82
      %s99 = sphi 0, %s83
      %s103 = sphi 0, %s103
      %s105 = sphi 0, %s103
      %s106 = sphi 0, %s105
      %s120 = sphi 0, %s106
      %s124 = sphi 0, %s124
      %s126 = sphi 0, %s124
      %s127 = sphi 0, %s126
      %s141 = sphi 0, %s127
      %s145 = sphi 0, %s145
      %s147 = sphi 0, %s145
      %s148 = sphi 0, %s147
      %s162 = sphi 0, %s148
      %s166 = sphi 0, %s166
      %s168 = sphi 0, %s166
      %s169 = sphi 0, %s168
      %s183 = sphi 0, %s169
      %s187 = sphi 0, %s187
      %s189 = sphi 0, %s187
      %s190 = sphi 0, %s189
      %s204 = sphi 0, %s190
      %s208 = sphi 0, %s208
      %s210 = sphi 0, %s208
      %s211 = sphi 0, %s210
      %s225 = sphi 0, %s211
      %s229 = sphi 0, %s229
      %s231 = sphi 0, %s229
      %s232 = sphi 0, %s231
      %s246 = sphi 0, %s232
      %s250 = sphi 0, %s250
      %s252 = sphi 0, %s250
      %s253 = sphi 0, %s252
      %s267 = sphi 0, %s253
      %s271 = sphi 0, %s271
      %s273 = sphi 0, %s271
      %s274 = sphi 0, %s273
      %s288 = sphi 0, %s274
      %s292 = sphi 0, %s292
      %s294 = sphi 0, %s292
      %s295 = sphi 0, %s294
      %s309 = sphi 0, %s295
      %s313 = sphi 0, %s313
      %s315 = sphi 0, %s313
      %s316 = sphi 0, %s315
      %s330 = sphi 0, %s316
      %s334 = sphi 0, %s334
      %s336 = sphi 0, %s334
      %s337 = sphi 0, %s336
      %s351 = sphi 0, %s337
      %s355 = sphi 0, %s355
      %s357 = sphi 0, %s355
      %s358 = sphi 0, %s357
      %s372 = sphi 0, %s358
      %s376 = sphi 0, %s376
      %s378 = sphi 0, %s376
      %s379 = sphi 0, %s378
      %s393 = sphi 0, %s379
      %s401 = sphi 0, %s403
      %s404 = sphi 0, %s401
      %s405 = sphi 0, %s404
      %s421 = sphi 0, %s405
    $region4: #{tpu_custom_call.1} parent=1 // loop_header_branch
      %34 = sbr.rel (%p32) target = $region8
    $region5: #{tpu_custom_call.1} parent=1 // loop_body
      %s36 = ssub.s32 %s31, 1
      %s37 = ssub.s32 %s31, 2
      %s44 = sadd.s32 1, %s39
      %p45 = scmp.ge.s32.totalorder %s44, 1
      %s46 = scalar_select %p45, 0, %s44
      %s47 = sadd.s32 1, %s38
      %s48 = scalar_select %p45, %s47, %s38
      %p49 = scmp.ge.s32.totalorder %s48, 2
      %s50 = scalar_select %p49, 0, %s48
      %s51 = ssub.s32 %s38, %s50
      %p52 = scmp.eq.s32.totalorder %s51, 0
      %s54 = sadd.s32 %s53, 1
      %s55 = scalar_select %p52, %s53, %s54
      %p58 = pneg %p52
      %p59 = scmp.eq.s32.totalorder %s31, 1
      %p60 = por %p58, %p59
      %p61 = scmp.ne.s32.totalorder %s53, %s56
      %p62 = scmp.eq.s32.totalorder %s31, 0
      %p63 = por %p61, %p62
      %p64 = scmp.ne.s32.totalorder %s53, %s56
      %p65 = scmp.eq.s32.totalorder %s36, 1
      %p66 = por %p64, %p65
      %p67 = scmp.ne.s32.totalorder %s56, %s57
      %p68 = scmp.eq.s32.totalorder %s36, 0
      %p69 = por %p67, %p68
      %p70 = scmp.ne.s32.totalorder %s56, %s57
      %p71 = scmp.eq.s32.totalorder %s37, 1
      %p72 = por %p70, %p71
      %p74 = scmp.ne.s32.totalorder %s57, %s73
      %p75 = scmp.eq.s32.totalorder %s37, 0
      %p76 = por %p74, %p75
      %s77 = ssub.s32 %s38, %s50
      %p78 = scmp.eq.s32.totalorder %s77, 0
      %s80 = sadd.s32 %s79, 1
      %s81 = scalar_select %p78, %s79, %s80
      %p84 = pneg %p78
      %p85 = scmp.eq.s32.totalorder %s31, 1
      %p86 = por %p84, %p85
      %p87 = scmp.ne.s32.totalorder %s79, %s82
      %p88 = scmp.eq.s32.totalorder %s31, 0
      %p89 = por %p87, %p88
      %p90 = scmp.ne.s32.totalorder %s79, %s82
      %p91 = scmp.eq.s32.totalorder %s36, 1
      %p92 = por %p90, %p91
      %p93 = scmp.ne.s32.totalorder %s82, %s83
      %p94 = scmp.eq.s32.totalorder %s36, 0
      %p95 = por %p93, %p94
      %p96 = scmp.ne.s32.totalorder %s82, %s83
      %p97 = scmp.eq.s32.totalorder %s37, 1
      %p98 = por %p96, %p97
      %p100 = scmp.ne.s32.totalorder %s83, %s99
      %p101 = scmp.eq.s32.totalorder %s37, 0
      %p102 = por %p100, %p101
      %s104 = sadd.s32 %s103, 1
      %p107 = scmp.eq.s32.totalorder %s31, 1
      %p108 = scmp.ne.s32.totalorder %s103, %s105
      %p109 = scmp.eq.s32.totalorder %s31, 0
      %p110 = por %p108, %p109
      %p111 = scmp.ne.s32.totalorder %s103, %s105
      %p112 = scmp.eq.s32.totalorder %s36, 1
      %p113 = por %p111, %p112
      %p114 = scmp.ne.s32.totalorder %s105, %s106
      %p115 = scmp.eq.s32.totalorder %s36, 0
      %p116 = por %p114, %p115
      %p117 = scmp.ne.s32.totalorder %s105, %s106
      %p118 = scmp.eq.s32.totalorder %s37, 1
      %p119 = por %p117, %p118
      %p121 = scmp.ne.s32.totalorder %s106, %s120
      %p122 = scmp.eq.s32.totalorder %s37, 0
      %p123 = por %p121, %p122
      %s125 = sadd.s32 %s124, 1
      %p128 = scmp.eq.s32.totalorder %s31, 1
      %p129 = scmp.ne.s32.totalorder %s124, %s126
      %p130 = scmp.eq.s32.totalorder %s31, 0
      %p131 = por %p129, %p130
      %p132 = scmp.ne.s32.totalorder %s124, %s126
      %p133 = scmp.eq.s32.totalorder %s36, 1
      %p134 = por %p132, %p133
      %p135 = scmp.ne.s32.totalorder %s126, %s127
      %p136 = scmp.eq.s32.totalorder %s36, 0
      %p137 = por %p135, %p136
      %p138 = scmp.ne.s32.totalorder %s126, %s127
      %p139 = scmp.eq.s32.totalorder %s37, 1
      %p140 = por %p138, %p139
      %p142 = scmp.ne.s32.totalorder %s127, %s141
      %p143 = scmp.eq.s32.totalorder %s37, 0
      %p144 = por %p142, %p143
      %s146 = sadd.s32 %s145, 1
      %p149 = scmp.eq.s32.totalorder %s31, 1
      %p150 = scmp.ne.s32.totalorder %s145, %s147
      %p151 = scmp.eq.s32.totalorder %s31, 0
      %p152 = por %p150, %p151
      %p153 = scmp.ne.s32.totalorder %s145, %s147
      %p154 = scmp.eq.s32.totalorder %s36, 1
      %p155 = por %p153, %p154
      %p156 = scmp.ne.s32.totalorder %s147, %s148
      %p157 = scmp.eq.s32.totalorder %s36, 0
      %p158 = por %p156, %p157
      %p159 = scmp.ne.s32.totalorder %s147, %s148
      %p160 = scmp.eq.s32.totalorder %s37, 1
      %p161 = por %p159, %p160
      %p163 = scmp.ne.s32.totalorder %s148, %s162
      %p164 = scmp.eq.s32.totalorder %s37, 0
      %p165 = por %p163, %p164
      %s167 = sadd.s32 %s166, 1
      %p170 = scmp.eq.s32.totalorder %s31, 1
      %p171 = scmp.ne.s32.totalorder %s166, %s168
      %p172 = scmp.eq.s32.totalorder %s31, 0
      %p173 = por %p171, %p172
      %p174 = scmp.ne.s32.totalorder %s166, %s168
      %p175 = scmp.eq.s32.totalorder %s36, 1
      %p176 = por %p174, %p175
      %p177 = scmp.ne.s32.totalorder %s168, %s169
      %p178 = scmp.eq.s32.totalorder %s36, 0
      %p179 = por %p177, %p178
      %p180 = scmp.ne.s32.totalorder %s168, %s169
      %p181 = scmp.eq.s32.totalorder %s37, 1
      %p182 = por %p180, %p181
      %p184 = scmp.ne.s32.totalorder %s169, %s183
      %p185 = scmp.eq.s32.totalorder %s37, 0
      %p186 = por %p184, %p185
      %s188 = sadd.s32 %s187, 1
      %p191 = scmp.eq.s32.totalorder %s31, 1
      %p192 = scmp.ne.s32.totalorder %s187, %s189
      %p193 = scmp.eq.s32.totalorder %s31, 0
      %p194 = por %p192, %p193
      %p195 = scmp.ne.s32.totalorder %s187, %s189
      %p196 = scmp.eq.s32.totalorder %s36, 1
      %p197 = por %p195, %p196
      %p198 = scmp.ne.s32.totalorder %s189, %s190
      %p199 = scmp.eq.s32.totalorder %s36, 0
      %p200 = por %p198, %p199
      %p201 = scmp.ne.s32.totalorder %s189, %s190
      %p202 = scmp.eq.s32.totalorder %s37, 1
      %p203 = por %p201, %p202
      %p205 = scmp.ne.s32.totalorder %s190, %s204
      %p206 = scmp.eq.s32.totalorder %s37, 0
      %p207 = por %p205, %p206
      %s209 = sadd.s32 %s208, 1
      %p212 = scmp.eq.s32.totalorder %s31, 1
      %p213 = scmp.ne.s32.totalorder %s208, %s210
      %p214 = scmp.eq.s32.totalorder %s31, 0
      %p215 = por %p213, %p214
      %p216 = scmp.ne.s32.totalorder %s208, %s210
      %p217 = scmp.eq.s32.totalorder %s36, 1
      %p218 = por %p216, %p217
      %p219 = scmp.ne.s32.totalorder %s210, %s211
      %p220 = scmp.eq.s32.totalorder %s36, 0
      %p221 = por %p219, %p220
      %p222 = scmp.ne.s32.totalorder %s210, %s211
      %p223 = scmp.eq.s32.totalorder %s37, 1
      %p224 = por %p222, %p223
      %p226 = scmp.ne.s32.totalorder %s211, %s225
      %p227 = scmp.eq.s32.totalorder %s37, 0
      %p228 = por %p226, %p227
      %s230 = sadd.s32 %s229, 1
      %p233 = scmp.eq.s32.totalorder %s31, 1
      %p234 = scmp.ne.s32.totalorder %s229, %s231
      %p235 = scmp.eq.s32.totalorder %s31, 0
      %p236 = por %p234, %p235
      %p237 = scmp.ne.s32.totalorder %s229, %s231
      %p238 = scmp.eq.s32.totalorder %s36, 1
      %p239 = por %p237, %p238
      %p240 = scmp.ne.s32.totalorder %s231, %s232
      %p241 = scmp.eq.s32.totalorder %s36, 0
      %p242 = por %p240, %p241
      %p243 = scmp.ne.s32.totalorder %s231, %s232
      %p244 = scmp.eq.s32.totalorder %s37, 1
      %p245 = por %p243, %p244
      %p247 = scmp.ne.s32.totalorder %s232, %s246
      %p248 = scmp.eq.s32.totalorder %s37, 0
      %p249 = por %p247, %p248
      %s251 = sadd.s32 %s250, 1
      %p254 = scmp.eq.s32.totalorder %s31, 1
      %p255 = scmp.ne.s32.totalorder %s250, %s252
      %p256 = scmp.eq.s32.totalorder %s31, 0
      %p257 = por %p255, %p256
      %p258 = scmp.ne.s32.totalorder %s250, %s252
      %p259 = scmp.eq.s32.totalorder %s36, 1
      %p260 = por %p258, %p259
      %p261 = scmp.ne.s32.totalorder %s252, %s253
      %p262 = scmp.eq.s32.totalorder %s36, 0
      %p263 = por %p261, %p262
      %p264 = scmp.ne.s32.totalorder %s252, %s253
      %p265 = scmp.eq.s32.totalorder %s37, 1
      %p266 = por %p264, %p265
      %p268 = scmp.ne.s32.totalorder %s253, %s267
      %p269 = scmp.eq.s32.totalorder %s37, 0
      %p270 = por %p268, %p269
      %s272 = sadd.s32 %s271, 1
      %p275 = scmp.eq.s32.totalorder %s31, 1
      %p276 = scmp.ne.s32.totalorder %s271, %s273
      %p277 = scmp.eq.s32.totalorder %s31, 0
      %p278 = por %p276, %p277
      %p279 = scmp.ne.s32.totalorder %s271, %s273
      %p280 = scmp.eq.s32.totalorder %s36, 1
      %p281 = por %p279, %p280
      %p282 = scmp.ne.s32.totalorder %s273, %s274
      %p283 = scmp.eq.s32.totalorder %s36, 0
      %p284 = por %p282, %p283
      %p285 = scmp.ne.s32.totalorder %s273, %s274
      %p286 = scmp.eq.s32.totalorder %s37, 1
      %p287 = por %p285, %p286
      %p289 = scmp.ne.s32.totalorder %s274, %s288
      %p290 = scmp.eq.s32.totalorder %s37, 0
      %p291 = por %p289, %p290
      %s293 = sadd.s32 %s292, 1
      %p296 = scmp.eq.s32.totalorder %s31, 1
      %p297 = scmp.ne.s32.totalorder %s292, %s294
      %p298 = scmp.eq.s32.totalorder %s31, 0
      %p299 = por %p297, %p298
      %p300 = scmp.ne.s32.totalorder %s292, %s294
      %p301 = scmp.eq.s32.totalorder %s36, 1
      %p302 = por %p300, %p301
      %p303 = scmp.ne.s32.totalorder %s294, %s295
      %p304 = scmp.eq.s32.totalorder %s36, 0
      %p305 = por %p303, %p304
      %p306 = scmp.ne.s32.totalorder %s294, %s295
      %p307 = scmp.eq.s32.totalorder %s37, 1
      %p308 = por %p306, %p307
      %p310 = scmp.ne.s32.totalorder %s295, %s309
      %p311 = scmp.eq.s32.totalorder %s37, 0
      %p312 = por %p310, %p311
      %s314 = sadd.s32 %s313, 1
      %p317 = scmp.eq.s32.totalorder %s31, 1
      %p318 = scmp.ne.s32.totalorder %s313, %s315
      %p319 = scmp.eq.s32.totalorder %s31, 0
      %p320 = por %p318, %p319
      %p321 = scmp.ne.s32.totalorder %s313, %s315
      %p322 = scmp.eq.s32.totalorder %s36, 1
      %p323 = por %p321, %p322
      %p324 = scmp.ne.s32.totalorder %s315, %s316
      %p325 = scmp.eq.s32.totalorder %s36, 0
      %p326 = por %p324, %p325
      %p327 = scmp.ne.s32.totalorder %s315, %s316
      %p328 = scmp.eq.s32.totalorder %s37, 1
      %p329 = por %p327, %p328
      %p331 = scmp.ne.s32.totalorder %s316, %s330
      %p332 = scmp.eq.s32.totalorder %s37, 0
      %p333 = por %p331, %p332
      %s335 = sadd.s32 %s334, 1
      %p338 = scmp.eq.s32.totalorder %s31, 1
      %p339 = scmp.ne.s32.totalorder %s334, %s336
      %p340 = scmp.eq.s32.totalorder %s31, 0
      %p341 = por %p339, %p340
      %p342 = scmp.ne.s32.totalorder %s334, %s336
      %p343 = scmp.eq.s32.totalorder %s36, 1
      %p344 = por %p342, %p343
      %p345 = scmp.ne.s32.totalorder %s336, %s337
      %p346 = scmp.eq.s32.totalorder %s36, 0
      %p347 = por %p345, %p346
      %p348 = scmp.ne.s32.totalorder %s336, %s337
      %p349 = scmp.eq.s32.totalorder %s37, 1
      %p350 = por %p348, %p349
      %p352 = scmp.ne.s32.totalorder %s337, %s351
      %p353 = scmp.eq.s32.totalorder %s37, 0
      %p354 = por %p352, %p353
      %s356 = sadd.s32 %s355, 1
      %p359 = scmp.eq.s32.totalorder %s31, 1
      %p360 = scmp.ne.s32.totalorder %s355, %s357
      %p361 = scmp.eq.s32.totalorder %s31, 0
      %p362 = por %p360, %p361
      %p363 = scmp.ne.s32.totalorder %s355, %s357
      %p364 = scmp.eq.s32.totalorder %s36, 1
      %p365 = por %p363, %p364
      %p366 = scmp.ne.s32.totalorder %s357, %s358
      %p367 = scmp.eq.s32.totalorder %s36, 0
      %p368 = por %p366, %p367
      %p369 = scmp.ne.s32.totalorder %s357, %s358
      %p370 = scmp.eq.s32.totalorder %s37, 1
      %p371 = por %p369, %p370
      %p373 = scmp.ne.s32.totalorder %s358, %s372
      %p374 = scmp.eq.s32.totalorder %s37, 0
      %p375 = por %p373, %p374
      %s377 = sadd.s32 %s376, 1
      %p380 = scmp.eq.s32.totalorder %s31, 1
      %p381 = scmp.ne.s32.totalorder %s376, %s378
      %p382 = scmp.eq.s32.totalorder %s31, 0
      %p383 = por %p381, %p382
      %p384 = scmp.ne.s32.totalorder %s376, %s378
      %p385 = scmp.eq.s32.totalorder %s36, 1
      %p386 = por %p384, %p385
      %p387 = scmp.ne.s32.totalorder %s378, %s379
      %p388 = scmp.eq.s32.totalorder %s36, 0
      %p389 = por %p387, %p388
      %p390 = scmp.ne.s32.totalorder %s378, %s379
      %p391 = scmp.eq.s32.totalorder %s37, 1
      %p392 = por %p390, %p391
      %p394 = scmp.ne.s32.totalorder %s379, %s393
      %p395 = scmp.eq.s32.totalorder %s37, 0
      %p396 = por %p394, %p395
      %s397 = ssub.s32 %s38, %s50
      %s398 = ssub.s32 %s39, %s46
      %s399 = sor.u32 %s397, %s398
      %p400 = scmp.eq.s32.totalorder %s399, 0
      %s402 = sadd.s32 %s401, 1
      %s403 = scalar_select %p400, %s401, %s402
      %p406 = pneg %p400
      %p407 = scmp.eq.s32.totalorder %s31, 1
      %p408 = por %p406, %p407
      %p409 = scmp.ne.s32.totalorder %s401, %s404
      %p410 = scmp.eq.s32.totalorder %s31, 0
      %p411 = por %p409, %p410
      %p412 = scmp.ne.s32.totalorder %s401, %s404
      %p413 = scmp.eq.s32.totalorder %s36, 1
      %p414 = por %p412, %p413
      %p415 = scmp.ne.s32.totalorder %s404, %s405
      %p416 = scmp.eq.s32.totalorder %s36, 0
      %p417 = por %p415, %p416
      %p418 = scmp.ne.s32.totalorder %s404, %s405
      %p419 = scmp.eq.s32.totalorder %s37, 1
      %p420 = por %p418, %p419
      %p422 = scmp.ne.s32.totalorder %s405, %s421
      %p423 = scmp.eq.s32.totalorder %s37, 0
      %p424 = por %p422, %p423
      %p425 = scmp.le.s32.totalorder 1, %s31
      %p426 = scmp.lt.s32.totalorder %s31, 3
      %p427 = pnand %p425, %p426
      %p428 = pneg %p427
      // Predicated region
      $region9: #{tpu_custom_call.1} parent=5 // pred_check
        _
      $region10: #{tpu_custom_call.1} parent=5 // pred_check_branch
        %430 = sbr.rel (%p427) target = $region12
      $region11: #{tpu_custom_call.1} parent=5 // pred_region
        %s431 = ssub.s32 %s31, 1
        // Predicated region
        $region13: #{tpu_custom_call.1} parent=11 // pred_check
          %p432 = pneg %p116
        $region14: #{tpu_custom_call.1} parent=11 // pred_check_branch
          %434 = sbr.rel (%p432) target = $region16
        $region15: #{tpu_custom_call.1} parent=11 // pred_region
          %s436 = ssub.s32 16, 16
          %437 = vsyncadd [#allocation9], %s436
          %s439 = sshll.u32 [#allocation8], 4
          %s440 = int_to_ptr.vmem [resolvable:$true] %s439
          %442 = dma.hbm_to_vmem [thread:$0]  %s2, 16, %s440, [#allocation9]
        $region16: #{tpu_custom_call.1} parent=11 // pred_fallthru
          _
        // Predicated region
        $region17: #{tpu_custom_call.1} parent=11 // pred_check
          %p443 = pneg %p137
        $region18: #{tpu_custom_call.1} parent=11 // pred_check_branch
          %445 = sbr.rel (%p443) target = $region20
        $region19: #{tpu_custom_call.1} parent=11 // pred_region
          %s447 = ssub.s32 16, 16
          %448 = vsyncadd [#allocation9], %s447
          %s450 = sshll.u32 [#allocation10], 4
          %s451 = int_to_ptr.vmem [resolvable:$true] %s450
          %453 = dma.hbm_to_vmem [thread:$0]  %s3, 16, %s451, [#allocation9]
        $region20: #{tpu_custom_call.1} parent=11 // pred_fallthru
          _
        // Predicated region
        $region21: #{tpu_custom_call.1} parent=11 // pred_check
          %p454 = pneg %p158
        $region22: #{tpu_custom_call.1} parent=11 // pred_check_branch
          %456 = sbr.rel (%p454) target = $region24
        $region23: #{tpu_custom_call.1} parent=11 // pred_region
          _
        $region24: #{tpu_custom_call.1} parent=11 // pred_fallthru
          _
        // Predicated region
        $region25: #{tpu_custom_call.1} parent=11 // pred_check
          %p457 = pneg %p179
        $region26: #{tpu_custom_call.1} parent=11 // pred_check_branch
          %459 = sbr.rel (%p457) target = $region28
        $region27: #{tpu_custom_call.1} parent=11 // pred_region
          %s461 = ssub.s32 16, 16
          %462 = vsyncadd [#allocation12], %s461
          %s464 = sshll.u32 [#allocation11], 4
          %s465 = int_to_ptr.vmem [resolvable:$true] %s464
          %467 = dma.hbm_to_vmem [thread:$0]  %s5, 16, %s465, [#allocation12]
        $region28: #{tpu_custom_call.1} parent=11 // pred_fallthru
          _
        // Predicated region
        $region29: #{tpu_custom_call.1} parent=11 // pred_check
          %p468 = pneg %p200
        $region30: #{tpu_custom_call.1} parent=11 // pred_check_branch
          %470 = sbr.rel (%p468) target = $region32
        $region31: #{tpu_custom_call.1} parent=11 // pred_region
          _
        $region32: #{tpu_custom_call.1} parent=11 // pred_fallthru
          _
        // Predicated region
        $region33: #{tpu_custom_call.1} parent=11 // pred_check
          %p471 = pneg %p221
        $region34: #{tpu_custom_call.1} parent=11 // pred_check_branch
          %473 = sbr.rel (%p471) target = $region36
        $region35: #{tpu_custom_call.1} parent=11 // pred_region
          %s475 = ssub.s32 16, 16
          %476 = vsyncadd [#allocation12], %s475
          %s478 = sshll.u32 [#allocation13], 4
          %s479 = int_to_ptr.vmem [resolvable:$true] %s478
          %481 = dma.hbm_to_vmem [thread:$0]  %s7, 16, %s479, [#allocation12]
        $region36: #{tpu_custom_call.1} parent=11 // pred_fallthru
          _
        // Predicated region
        $region37: #{tpu_custom_call.1} parent=11 // pred_check
          %p482 = pneg %p242
        $region38: #{tpu_custom_call.1} parent=11 // pred_check_branch
          %484 = sbr.rel (%p482) target = $region40
        $region39: #{tpu_custom_call.1} parent=11 // pred_region
          %s486 = ssub.s32 16, 16
          %487 = vsyncadd [#allocation15], %s486
          %s489 = sshll.u32 [#allocation14], 4
          %s490 = int_to_ptr.vmem [resolvable:$true] %s489
          %492 = dma.hbm_to_vmem [thread:$0]  %s8, 16, %s490, [#allocation15]
        $region40: #{tpu_custom_call.1} parent=11 // pred_fallthru
          _
        // Predicated region
        $region41: #{tpu_custom_call.1} parent=11 // pred_check
          %p493 = pneg %p263
        $region42: #{tpu_custom_call.1} parent=11 // pred_check_branch
          %495 = sbr.rel (%p493) target = $region44
        $region43: #{tpu_custom_call.1} parent=11 // pred_region
          %s497 = ssub.s32 16, 16
          %498 = vsyncadd [#allocation15], %s497
          %s500 = sshll.u32 [#allocation16], 4
          %s501 = int_to_ptr.vmem [resolvable:$true] %s500
          %503 = dma.hbm_to_vmem [thread:$0]  %s9, 16, %s501, [#allocation15]
        $region44: #{tpu_custom_call.1} parent=11 // pred_fallthru
          _
        // Predicated region
        $region45: #{tpu_custom_call.1} parent=11 // pred_check
          %p504 = pneg %p284
        $region46: #{tpu_custom_call.1} parent=11 // pred_check_branch
          %506 = sbr.rel (%p504) target = $region48
        $region47: #{tpu_custom_call.1} parent=11 // pred_region
          _
        $region48: #{tpu_custom_call.1} parent=11 // pred_fallthru
          _
        // Predicated region
        $region49: #{tpu_custom_call.1} parent=11 // pred_check
          %p507 = pneg %p305
        $region50: #{tpu_custom_call.1} parent=11 // pred_check_branch
          %509 = sbr.rel (%p507) target = $region52
        $region51: #{tpu_custom_call.1} parent=11 // pred_region
          _
        $region52: #{tpu_custom_call.1} parent=11 // pred_fallthru
          _
        // Predicated region
        $region53: #{tpu_custom_call.1} parent=11 // pred_check
          %p510 = pneg %p326
        $region54: #{tpu_custom_call.1} parent=11 // pred_check_branch
          %512 = sbr.rel (%p510) target = $region56
        $region55: #{tpu_custom_call.1} parent=11 // pred_region
          _
        $region56: #{tpu_custom_call.1} parent=11 // pred_fallthru
          _
        // Predicated region
        $region57: #{tpu_custom_call.1} parent=11 // pred_check
          %p513 = pneg %p347
        $region58: #{tpu_custom_call.1} parent=11 // pred_check_branch
          %515 = sbr.rel (%p513) target = $region60
        $region59: #{tpu_custom_call.1} parent=11 // pred_region
          _
        $region60: #{tpu_custom_call.1} parent=11 // pred_fallthru
          _
        // Predicated region
        $region61: #{tpu_custom_call.1} parent=11 // pred_check
          %p516 = pneg %p368
        $region62: #{tpu_custom_call.1} parent=11 // pred_check_branch
          %518 = sbr.rel (%p516) target = $region64
        $region63: #{tpu_custom_call.1} parent=11 // pred_region
          _
        $region64: #{tpu_custom_call.1} parent=11 // pred_fallthru
          _
        // Predicated region
        $region65: #{tpu_custom_call.1} parent=11 // pred_check
          %p519 = pneg %p389
        $region66: #{tpu_custom_call.1} parent=11 // pred_check_branch
          %521 = sbr.rel (%p519) target = $region68
        $region67: #{tpu_custom_call.1} parent=11 // pred_region
          _
        $region68: #{tpu_custom_call.1} parent=11 // pred_fallthru
          _
      $region12: #{tpu_custom_call.1} parent=5 // pred_fallthru
        _
      %p522 = scmp.lt.s32.totalorder %s31, 2
      // Predicated region
      $region69: #{tpu_custom_call.1} parent=5 // pred_check
        %p523 = pneg %p522
      $region70: #{tpu_custom_call.1} parent=5 // pred_check_branch
        %525 = sbr.rel (%p523) target = $region72
      $region71: #{tpu_custom_call.1} parent=5 // pred_region
        // Predicated region
        $region73: #{tpu_custom_call.1} parent=71 // pred_check
          %p526 = pneg %p63
        $region74: #{tpu_custom_call.1} parent=71 // pred_check_branch
          %528 = sbr.rel (%p526) target = $region76
        $region75: #{tpu_custom_call.1} parent=71 // pred_region
          %p529 = scmp.lt.s32.totalorder %s38, 1
          %s530 = scalar_select %p529, %s38, 1
          %s531 = smul.addr %s530, 8
          %s532 = scalar_lea.vmem %s0, %s531
        $region76: #{tpu_custom_call.1} parent=71 // pred_fallthru
          _
        // Predicated region
        $region77: #{tpu_custom_call.1} parent=71 // pred_check
          %p533 = pneg %p89
        $region78: #{tpu_custom_call.1} parent=71 // pred_check_branch
          %535 = sbr.rel (%p533) target = $region80
        $region79: #{tpu_custom_call.1} parent=71 // pred_region
          %s536 = sand.u32 %s79, 1
          %s537 = scalar_lea.sflag [#allocation6], %s536
          %s538 = sand.u32 %s79, 1
          %s539 = scalar_lea.vmem [#allocation5], %s538
          %s541 = ssub.s32 16, 16
          %542 = vsyncadd %s537, %s541
          %s543 = smul.addr %s38, 16
          %s544 = scalar_lea.hbm %s1, %s543
          %s546 = sshll.u32 %s539, 4
          %s547 = int_to_ptr.vmem [resolvable:$true] %s546
          %549 = dma.hbm_to_vmem [thread:$0]  %s544, 16, %s547, %s537
        $region80: #{tpu_custom_call.1} parent=71 // pred_fallthru
          _
      $region72: #{tpu_custom_call.1} parent=5 // pred_fallthru
        _
      %p550 = scmp.le.s32.totalorder 1, %s31
      %p551 = scmp.lt.s32.totalorder %s31, 3
      %p552 = pnand %p550, %p551
      %p553 = pneg %p552
      // Predicated region
      $region81: #{tpu_custom_call.1} parent=5 // pred_check
        _
      $region82: #{tpu_custom_call.1} parent=5 // pred_check_branch
        %555 = sbr.rel (%p552) target = $region84
      $region83: #{tpu_custom_call.1} parent=5 // pred_region
        %s556 = ssub.s32 %s31, 1
        %s557 = sand.u32 %s82, 1
        %s558 = scalar_lea.sflag [#allocation6], %s557
        %s559 = sand.u32 %s82, 1
        %s560 = scalar_lea.vmem [#allocation5], %s559
        // Predicated region
        $region85: #{tpu_custom_call.1} parent=83 // pred_check
          %p561 = pneg %p95
        $region86: #{tpu_custom_call.1} parent=83 // pred_check_branch
          %563 = sbr.rel (%p561) target = $region88
        $region87: #{tpu_custom_call.1} parent=83 // pred_region
          %564 = dma.done %s558, 16
        $region88: #{tpu_custom_call.1} parent=83 // pred_fallthru
          _
        // Predicated region
        $region89: #{tpu_custom_call.1} parent=83 // pred_check
          %p565 = pneg %p116
        $region90: #{tpu_custom_call.1} parent=83 // pred_check_branch
          %567 = sbr.rel (%p565) target = $region92
        $region91: #{tpu_custom_call.1} parent=83 // pred_region
          %568 = dma.done [#allocation9], 16
        $region92: #{tpu_custom_call.1} parent=83 // pred_fallthru
          _
        // Predicated region
        $region93: #{tpu_custom_call.1} parent=83 // pred_check
          %p569 = pneg %p137
        $region94: #{tpu_custom_call.1} parent=83 // pred_check_branch
          %571 = sbr.rel (%p569) target = $region96
        $region95: #{tpu_custom_call.1} parent=83 // pred_region
          %572 = dma.done [#allocation9], 16
        $region96: #{tpu_custom_call.1} parent=83 // pred_fallthru
          _
        // Predicated region
        $region97: #{tpu_custom_call.1} parent=83 // pred_check
          %p573 = pneg %p179
        $region98: #{tpu_custom_call.1} parent=83 // pred_check_branch
          %575 = sbr.rel (%p573) target = $region100
        $region99: #{tpu_custom_call.1} parent=83 // pred_region
          %576 = dma.done [#allocation12], 16
        $region100: #{tpu_custom_call.1} parent=83 // pred_fallthru
          _
        // Predicated region
        $region101: #{tpu_custom_call.1} parent=83 // pred_check
          %p577 = pneg %p221
        $region102: #{tpu_custom_call.1} parent=83 // pred_check_branch
          %579 = sbr.rel (%p577) target = $region104
        $region103: #{tpu_custom_call.1} parent=83 // pred_region
          %580 = dma.done [#allocation12], 16
        $region104: #{tpu_custom_call.1} parent=83 // pred_fallthru
          _
        // Predicated region
        $region105: #{tpu_custom_call.1} parent=83 // pred_check
          %p581 = pneg %p242
        $region106: #{tpu_custom_call.1} parent=83 // pred_check_branch
          %583 = sbr.rel (%p581) target = $region108
        $region107: #{tpu_custom_call.1} parent=83 // pred_region
          %584 = dma.done [#allocation15], 16
        $region108: #{tpu_custom_call.1} parent=83 // pred_fallthru
          _
        // Predicated region
        $region109: #{tpu_custom_call.1} parent=83 // pred_check
          %p585 = pneg %p263
        $region110: #{tpu_custom_call.1} parent=83 // pred_check_branch
          %587 = sbr.rel (%p585) target = $region112
        $region111: #{tpu_custom_call.1} parent=83 // pred_region
          %588 = dma.done [#allocation15], 16
        $region112: #{tpu_custom_call.1} parent=83 // pred_fallthru
          _
        %p589 = scmp.lt.s32.totalorder %s40, 1
        %s590 = scalar_select %p589, %s40, 1
        %s591 = smul.addr %s590, 8
        %s592 = scalar_lea.vmem %s0, %s591
        %p593 = pneg %p69
        %p594 = pneg %p66
        %s595 = sand.u32 %s82, 1
        %s596 = scalar_lea.sflag [#allocation6], %s595
        %s597 = sand.u32 %s82, 1
        %s598 = scalar_lea.vmem [#allocation5], %s597
        %p599 = pneg %p95
        %p600 = pneg %p92
        %p601 = pneg %p116
        %p602 = pneg %p113
        %p603 = pneg %p137
        %p604 = pneg %p134
        %p605 = pneg %p158
        %p606 = pneg %p155
        %p607 = pneg %p179
        %p608 = pneg %p176
        %p609 = pneg %p200
        %p610 = pneg %p197
        %p611 = pneg %p221
        %p612 = pneg %p218
        %p613 = pneg %p242
        %p614 = pneg %p239
        %p615 = pneg %p263
        %p616 = pneg %p260
        %p617 = pneg %p284
        %p618 = pneg %p281
        %p619 = pneg %p305
        %p620 = pneg %p302
        %p621 = pneg %p326
        %p622 = pneg %p323
        %p623 = pneg %p347
        %p624 = pneg %p344
        %p625 = pneg %p368
        %p626 = pneg %p365
        %p627 = pneg %p389
        %p628 = pneg %p386
        %p629 = pneg %p417
        %p630 = pneg %p414
        %s631 = sand.u32 %s404, 1
        %s632 = scalar_lea.sflag [#allocation7], %s631
        %s633 = sand.u32 %s404, 1
        %s634 = smul.addr %s633, 8
        %s635 = scalar_lea.vmem [#allocation17], %s634
        %p636 = scmp.lt.s32.totalorder %s40, 1
        %s637 = scalar_select %p636, %s40, 1
        %s638 = smul.addr %s637, 8
        %s639 = scalar_lea.vmem %s0, %s638
        %v641 = vld [vmem:[#allocation8] sm:$0x1]
        %v642 = vld [vmem:[#allocation10] sm:$0x1]
        %p643 = scmp.eq.s32.totalorder %s41, 0
        // Predicated region
        $region113: #{tpu_custom_call.1} parent=83 // pred_check
          %p644 = pneg %p643
        $region114: #{tpu_custom_call.1} parent=83 // pred_check_branch
          %646 = sbr.rel (%p644) target = $region116
        $region115: #{tpu_custom_call.1} parent=83 // pred_region
          %v647 = vld [vmem:[%s639] sm:$0xff]
          %vm648 = vcmask 261120
          %v649 = vsel %vm648, %v647, 0.0
          %650 = vadd.xlane.f32.xlu0 %v649
          %v651 = vpop.xlane.xlu0 %650
          %v652 = vmul.f32 %v647, %v647
          %v653 = vsel %vm648, %v652, 0.0
          %654 = vadd.xlane.f32.xlu0 %v653
          %v655 = vpop.xlane.xlu0 %654
          %v656 = vmul.f32 %v651, 0.03125
          %v657 = vmul.f32 %v655, 0.03125
          %v658 = vmul.f32 %v656, %v656
          %v659 = vsub.f32 %v657, %v658
          %v660 = vmax.f32 %v659, 0.0
          %v661 = vsub.f32 %v647, %v656
          %v662 = vadd.f32 %v660, 1e-06
          %v663 = vrsqrt.pop %v662
          %v664 = vmul.f32 %v661, %v663
          %v666 = vlaneseq
          %v667 = vshrl.u32 %v666, 7
          %v668 = vsub.s32 0, %v667
          %v669 = vrot.slane %v641, %v668
          %v671 = vmul.f32 %v664, %v669
          %v673 = vlaneseq
          %v674 = vshrl.u32 %v673, 7
          %v675 = vsub.s32 0, %v674
          %v676 = vrot.slane %v642, %v675
          %v678 = vadd.f32 %v671, %v676
          %v679 = vpack.c.bf16 %v678, %v678
          %v680 = vld [vmem:[%s4] sm:$0xf]
          %v681 = vld [vmem:[%s4 + $0x4] sm:$0xf]
          %v682 = vld [vmem:[%s4 + $0x8] sm:$0xf]
          %v683 = vld [vmem:[%s4 + $0xc] sm:$0xf]
          %v684 = vld [vmem:[#allocation11] sm:$0x1]
          %v686 = vlaneseq
          %v687 = vshrl.u32 %v686, 7
          %v688 = vsub.s32 0, %v687
          %v689 = vrot.slane %v684, %v688
          %v695 = vunpack.c.l.b16 %v680
          %v696 = vunpack.c.l.b16 %v681
          %v697 = vunpack.c.l.b16 %v682
          %v698 = vunpack.c.l.b16 %v683
          %v699 = vpack.c.b16 %v696, %v695
          %v700 = vpack.c.b16 %v698, %v697
          %v704 = vsel %vm648, %v679, 0
          %706 = vmatprep.subr.bf16.mxu0 0
          %707 = vmatpush1.bf16.msra.mxu0 0
          %708 = vmatprep.subr.bf16.mxu0 0
          %709 = vmatpush1.bf16.msra.mxu0 0
          %710 = vmatprep.subr.bf16.mxu0 0
          %711 = vmatpush1.bf16.msra.mxu0 0
          %712 = vmatprep.subr.bf16.mxu0 0
          %713 = vmatpush1.bf16.msra.mxu0 0
          %714 = vmatprep.subr.bf16.mxu0 0
          %715 = vmatpush1.bf16.msra.mxu0 0
          %716 = vmatprep.subr.bf16.mxu0 0
          %717 = vmatpush1.bf16.msra.mxu0 0
          %718 = vmatprep.subr.bf16.mxu0 0
          %719 = vmatpush1.bf16.msra.mxu0 %v700
          %720 = vmatprep.subr.bf16.mxu0 0
          %721 = vmatpush1.bf16.msra.mxu0 %v699
          %722 = vmatprep.subr.bf16.mxu0 0
          %723 = vmatpush2.bf16.msra.mxu0 0
          %724 = vmatprep.subr.bf16.mxu0 0
          %725 = vmatpush2.bf16.msra.mxu0 0
          %726 = vmatprep.subr.bf16.mxu0 0
          %727 = vmatpush2.bf16.msra.mxu0 0
          %728 = vmatprep.subr.bf16.mxu0 0
          %729 = vmatpush2.bf16.msra.mxu0 0
          %730 = vmatprep.subr.bf16.mxu0 0
          %731 = vmatpush2.bf16.msra.mxu0 0
          %732 = vmatprep.subr.bf16.mxu0 0
          %733 = vmatpush2.bf16.msra.mxu0 0
          %734 = vmatprep.subr.bf16.mxu0 0
          %735 = vmatpush2.bf16.msra.mxu0 0
          %736 = vmatprep.subr.bf16.mxu0 0
          %737 = vmatpush2.bf16.msra.mxu0 0
          %738 = vmatprep.mubr.bf16.mxu0 0
          %739 = vmatmul.mubr.bf16.gmra.mxu0 %v704
          %v740 = vpop.f32.mrf.mxu0
          %v741 = vadd.f32 %v689, %v740
          %v742 = vpop.f32.mrf.mxu0
          %v743 = vpop.f32.mrf.mxu0
          %v744 = vpop.f32.mrf.mxu0
          %745 = vdwg.mxu0
          %v746 = vpack.c.bf16 %v741, %v741
          %vm747 = vcmask 257024
          %748 = vst.msk [vmem:[#allocation2] sm:$0xf] %vm747, %v746
          %v750 = vunpack.c.l.b16 %v746
          %v751 = vpack.c.b16 %v750, %v750
          %752 = vrot.lane.b32.xlu0 %v751, 96
          %v753 = vpop.permute.xlu0 %752
          %755 = vst.msk [vmem:[#allocation3] sm:$0xf] %vm747, %v753
          %756 = vrot.lane.b32.xlu0 %v751, 64
          %v757 = vpop.permute.xlu0 %756
          %759 = vst.msk [vmem:[#allocation4] sm:$0xf] %vm747, %v757
        $region116: #{tpu_custom_call.1} parent=83 // pred_fallthru
          _
        %s760 = smul.u32 %s41, 8
        %s761 = scalar_lea.vmem %s639, %s760
        %v762 = vld [vmem:[%s761] sm:$0xff]
        %v763 = vld [vmem:[%s560] sm:$0x1]
        %s764 = sshra.s32 %s760, 3
        %s765 = sand.u32 %s760, 7
        %s766 = smul.addr %s764, 4
        %s767 = scalar_lea.vmem [#allocation2], %s766
        %v768 = vld [vmem:[%s767] sm:$0xf]
        %770 = vrot.lane.b32.xlu0 %v768, 120
        %v771 = vpop.permute.xlu0 %770
        %772 = vrot.lane.b32.xlu0 %v768, 112
        %v773 = vpop.permute.xlu0 %772
        %774 = vrot.lane.b32.xlu0 %v768, 104
        %v775 = vpop.permute.xlu0 %774
        %v778 = vpack.i.b16 %v771, %v768
        %v779 = vshrl.u32 %v768, 16
        %v780 = vshrl.u32 %v771, 16
        %v781 = vpack.i.b16 %v780, %v779
        %v784 = vpack.i.b16 %v775, %v773
        %v785 = vshrl.u32 %v773, 16
        %v786 = vshrl.u32 %v775, 16
        %v787 = vpack.i.b16 %v786, %v785
        %v790 = vunpack.c.l.s4 1983009808
        %v791 = vunpack.c.0.s8 %v790
        %v792 = vlaneseq
        %v793 = vshrl.u32 %v792, 7
        %v794 = vsub.s32 %v791, %v793
        %v795 = vrot.slane %v778, %v794
        %v798 = vunpack.c.l.s4 1983009808
        %v799 = vunpack.c.0.s8 %v798
        %v800 = vlaneseq
        %v801 = vshrl.u32 %v800, 7
        %v802 = vsub.s32 %v799, %v801
        %v803 = vrot.slane %v784, %v802
        %v804 = vcombine.low %v795, %v803
        %v805 = vcombine.high %v795, %v803
        %v807 = vunpack.c.l.s4 1934713408
        %v808 = vunpack.c.0.s8 %v807
        %v809 = vlaneseq
        %v810 = vshrl.u32 %v809, 7
        %v811 = vsub.s32 %v808, %v810
        %v812 = vrot.slane %v804, %v811
        %v814 = vunpack.c.l.s4 1934713408
        %v815 = vunpack.c.0.s8 %v814
        %v816 = vlaneseq
        %v817 = vshrl.u32 %v816, 7
        %v818 = vsub.s32 %v815, %v817
        %v819 = vrot.slane %v805, %v818
        %v820 = vcombine.high %v812, 0
        %v821 = vcombine.high %v819, 0
        %v824 = vunpack.c.l.s4 1983009808
        %v825 = vunpack.c.0.s8 %v824
        %v826 = vlaneseq
        %v827 = vshrl.u32 %v826, 7
        %v828 = vsub.s32 %v825, %v827
        %v829 = vrot.slane %v781, %v828
        %v832 = vunpack.c.l.s4 1983009808
        %v833 = vunpack.c.0.s8 %v832
        %v834 = vlaneseq
        %v835 = vshrl.u32 %v834, 7
        %v836 = vsub.s32 %v833, %v835
        %v837 = vrot.slane %v787, %v836
        %v838 = vcombine.low %v829, %v837
        %v839 = vcombine.high %v829, %v837
        %v841 = vunpack.c.l.s4 1934713408
        %v842 = vunpack.c.0.s8 %v841
        %v843 = vlaneseq
        %v844 = vshrl.u32 %v843, 7
        %v845 = vsub.s32 %v842, %v844
        %v846 = vrot.slane %v838, %v845
        %v848 = vunpack.c.l.s4 1934713408
        %v849 = vunpack.c.0.s8 %v848
        %v850 = vlaneseq
        %v851 = vshrl.u32 %v850, 7
        %v852 = vsub.s32 %v849, %v851
        %v853 = vrot.slane %v839, %v852
        %v854 = vcombine.high %v846, 0
        %v855 = vcombine.high %v853, 0
        %v856 = vcombine.low %v812, %v819
        %v858 = vunpack.c.l.s4 1983009808
        %v859 = vunpack.c.0.s8 %v858
        %v860 = vlaneseq
        %v861 = vshrl.u32 %v860, 7
        %v862 = vsub.s32 %v859, %v861
        %v863 = vrot.slane %v856, %v862
        %v864 = vcombine.low %v820, %v821
        %v866 = vunpack.c.l.s4 1983009808
        %v867 = vunpack.c.0.s8 %v866
        %v868 = vlaneseq
        %v869 = vshrl.u32 %v868, 7
        %v870 = vsub.s32 %v867, %v869
        %v871 = vrot.slane %v864, %v870
        %v872 = vcombine.low %v863, %v871
        %v874 = vunpack.c.l.s4 1934713408
        %v875 = vunpack.c.0.s8 %v874
        %v876 = vlaneseq
        %v877 = vshrl.u32 %v876, 7
        %v878 = vsub.s32 %v875, %v877
        %v879 = vrot.slane %v872, %v878
        %v880 = vcombine.high %v879, 0
        %v881 = vcombine.low %v846, %v853
        %v883 = vunpack.c.l.s4 1983009808
        %v884 = vunpack.c.0.s8 %v883
        %v885 = vlaneseq
        %v886 = vshrl.u32 %v885, 7
        %v887 = vsub.s32 %v884, %v886
        %v888 = vrot.slane %v881, %v887
        %v889 = vcombine.low %v854, %v855
        %v891 = vunpack.c.l.s4 1983009808
        %v892 = vunpack.c.0.s8 %v891
        %v893 = vlaneseq
        %v894 = vshrl.u32 %v893, 7
        %v895 = vsub.s32 %v892, %v894
        %v896 = vrot.slane %v889, %v895
        %v897 = vcombine.low %v888, %v896
        %v899 = vunpack.c.l.s4 1934713408
        %v900 = vunpack.c.0.s8 %v899
        %v901 = vlaneseq
        %v902 = vshrl.u32 %v901, 7
        %v903 = vsub.s32 %v900, %v902
        %v904 = vrot.slane %v897, %v903
        %v905 = vcombine.high %v904, 0
        %v908 = vpack.i.b16 %v904, %v879
        %v909 = vshrl.u32 %v879, 16
        %v910 = vshrl.u32 %v904, 16
        %v911 = vpack.i.b16 %v910, %v909
        %v914 = vpack.i.b16 %v905, %v880
        %v915 = vshrl.u32 %v880, 16
        %v916 = vshrl.u32 %v905, 16
        %v917 = vpack.i.b16 %v916, %v915
        %v918 = vld [vmem:[#allocation3] sm:$0xf]
        %920 = vrot.lane.b32.xlu0 %v918, 120
        %v921 = vpop.permute.xlu0 %920
        %922 = vrot.lane.b32.xlu0 %v918, 112
        %v923 = vpop.permute.xlu0 %922
        %924 = vrot.lane.b32.xlu0 %v918, 104
        %v925 = vpop.permute.xlu0 %924
        %v928 = vpack.i.b16 %v921, %v918
        %v929 = vshrl.u32 %v918, 16
        %v930 = vshrl.u32 %v921, 16
        %v931 = vpack.i.b16 %v930, %v929
        %v934 = vpack.i.b16 %v925, %v923
        %v935 = vshrl.u32 %v923, 16
        %v936 = vshrl.u32 %v925, 16
        %v937 = vpack.i.b16 %v936, %v935
        %v940 = vunpack.c.l.s4 1983009808
        %v941 = vunpack.c.0.s8 %v940
        %v942 = vlaneseq
        %v943 = vshrl.u32 %v942, 7
        %v944 = vsub.s32 %v941, %v943
        %v945 = vrot.slane %v928, %v944
        %v948 = vunpack.c.l.s4 1983009808
        %v949 = vunpack.c.0.s8 %v948
        %v950 = vlaneseq
        %v951 = vshrl.u32 %v950, 7
        %v952 = vsub.s32 %v949, %v951
        %v953 = vrot.slane %v934, %v952
        %v954 = vcombine.low %v945, %v953
        %v955 = vcombine.high %v945, %v953
        %v957 = vunpack.c.l.s4 1934713408
        %v958 = vunpack.c.0.s8 %v957
        %v959 = vlaneseq
        %v960 = vshrl.u32 %v959, 7
        %v961 = vsub.s32 %v958, %v960
        %v962 = vrot.slane %v954, %v961
        %v964 = vunpack.c.l.s4 1934713408
        %v965 = vunpack.c.0.s8 %v964
        %v966 = vlaneseq
        %v967 = vshrl.u32 %v966, 7
        %v968 = vsub.s32 %v965, %v967
        %v969 = vrot.slane %v955, %v968
        %v970 = vcombine.high %v962, 0
        %v971 = vcombine.high %v969, 0
        %v974 = vunpack.c.l.s4 1983009808
        %v975 = vunpack.c.0.s8 %v974
        %v976 = vlaneseq
        %v977 = vshrl.u32 %v976, 7
        %v978 = vsub.s32 %v975, %v977
        %v979 = vrot.slane %v931, %v978
        %v982 = vunpack.c.l.s4 1983009808
        %v983 = vunpack.c.0.s8 %v982
        %v984 = vlaneseq
        %v985 = vshrl.u32 %v984, 7
        %v986 = vsub.s32 %v983, %v985
        %v987 = vrot.slane %v937, %v986
        %v988 = vcombine.low %v979, %v987
        %v989 = vcombine.high %v979, %v987
        %v991 = vunpack.c.l.s4 1934713408
        %v992 = vunpack.c.0.s8 %v991
        %v993 = vlaneseq
        %v994 = vshrl.u32 %v993, 7
        %v995 = vsub.s32 %v992, %v994
        %v996 = vrot.slane %v988, %v995
        %v998 = vunpack.c.l.s4 1934713408
        %v999 = vunpack.c.0.s8 %v998
        %v1000 = vlaneseq
        %v1001 = vshrl.u32 %v1000, 7
        %v1002 = vsub.s32 %v999, %v1001
        %v1003 = vrot.slane %v989, %v1002
        %v1004 = vcombine.high %v996, 0
        %v1005 = vcombine.high %v1003, 0
        %v1006 = vcombine.low %v962, %v969
        %v1008 = vunpack.c.l.s4 1983009808
        %v1009 = vunpack.c.0.s8 %v1008
        %v1010 = vlaneseq
        %v1011 = vshrl.u32 %v1010, 7
        %v1012 = vsub.s32 %v1009, %v1011
        %v1013 = vrot.slane %v1006, %v1012
        %v1014 = vcombine.low %v970, %v971
        %v1016 = vunpack.c.l.s4 1983009808
        %v1017 = vunpack.c.0.s8 %v1016
        %v1018 = vlaneseq
        %v1019 = vshrl.u32 %v1018, 7
        %v1020 = vsub.s32 %v1017, %v1019
        %v1021 = vrot.slane %v1014, %v1020
        %v1022 = vcombine.low %v1013, %v1021
        %v1024 = vunpack.c.l.s4 1934713408
        %v1025 = vunpack.c.0.s8 %v1024
        %v1026 = vlaneseq
        %v1027 = vshrl.u32 %v1026, 7
        %v1028 = vsub.s32 %v1025, %v1027
        %v1029 = vrot.slane %v1022, %v1028
        %v1030 = vcombine.high %v1029, 0
        %v1031 = vcombine.low %v996, %v1003
        %v1033 = vunpack.c.l.s4 1983009808
        %v1034 = vunpack.c.0.s8 %v1033
        %v1035 = vlaneseq
        %v1036 = vshrl.u32 %v1035, 7
        %v1037 = vsub.s32 %v1034, %v1036
        %v1038 = vrot.slane %v1031, %v1037
        %v1039 = vcombine.low %v1004, %v1005
        %v1041 = vunpack.c.l.s4 1983009808
        %v1042 = vunpack.c.0.s8 %v1041
        %v1043 = vlaneseq
        %v1044 = vshrl.u32 %v1043, 7
        %v1045 = vsub.s32 %v1042, %v1044
        %v1046 = vrot.slane %v1039, %v1045
        %v1047 = vcombine.low %v1038, %v1046
        %v1049 = vunpack.c.l.s4 1934713408
        %v1050 = vunpack.c.0.s8 %v1049
        %v1051 = vlaneseq
        %v1052 = vshrl.u32 %v1051, 7
        %v1053 = vsub.s32 %v1050, %v1052
        %v1054 = vrot.slane %v1047, %v1053
        %v1055 = vcombine.high %v1054, 0
        %v1058 = vpack.i.b16 %v1054, %v1029
        %v1059 = vshrl.u32 %v1029, 16
        %v1060 = vshrl.u32 %v1054, 16
        %v1061 = vpack.i.b16 %v1060, %v1059
        %v1064 = vpack.i.b16 %v1055, %v1030
        %v1065 = vshrl.u32 %v1030, 16
        %v1066 = vshrl.u32 %v1055, 16
        %v1067 = vpack.i.b16 %v1066, %v1065
        %v1068 = vld [vmem:[#allocation4] sm:$0xf]
        %1070 = vrot.lane.b32.xlu0 %v1068, 120
        %v1071 = vpop.permute.xlu0 %1070
        %1072 = vrot.lane.b32.xlu0 %v1068, 112
        %v1073 = vpop.permute.xlu0 %1072
        %1074 = vrot.lane.b32.xlu0 %v1068, 104
        %v1075 = vpop.permute.xlu0 %1074
        %v1078 = vpack.i.b16 %v1071, %v1068
        %v1079 = vshrl.u32 %v1068, 16
        %v1080 = vshrl.u32 %v1071, 16
        %v1081 = vpack.i.b16 %v1080, %v1079
        %v1084 = vpack.i.b16 %v1075, %v1073
        %v1085 = vshrl.u32 %v1073, 16
        %v1086 = vshrl.u32 %v1075, 16
        %v1087 = vpack.i.b16 %v1086, %v1085
        %v1090 = vunpack.c.l.s4 1983009808
        %v1091 = vunpack.c.0.s8 %v1090
        %v1092 = vlaneseq
        %v1093 = vshrl.u32 %v1092, 7
        %v1094 = vsub.s32 %v1091, %v1093
        %v1095 = vrot.slane %v1078, %v1094
        %v1098 = vunpack.c.l.s4 1983009808
        %v1099 = vunpack.c.0.s8 %v1098
        %v1100 = vlaneseq
        %v1101 = vshrl.u32 %v1100, 7
        %v1102 = vsub.s32 %v1099, %v1101
        %v1103 = vrot.slane %v1084, %v1102
        %v1104 = vcombine.low %v1095, %v1103
        %v1105 = vcombine.high %v1095, %v1103
        %v1107 = vunpack.c.l.s4 1934713408
        %v1108 = vunpack.c.0.s8 %v1107
        %v1109 = vlaneseq
        %v1110 = vshrl.u32 %v1109, 7
        %v1111 = vsub.s32 %v1108, %v1110
        %v1112 = vrot.slane %v1104, %v1111
        %v1114 = vunpack.c.l.s4 1934713408
        %v1115 = vunpack.c.0.s8 %v1114
        %v1116 = vlaneseq
        %v1117 = vshrl.u32 %v1116, 7
        %v1118 = vsub.s32 %v1115, %v1117
        %v1119 = vrot.slane %v1105, %v1118
        %v1120 = vcombine.high %v1112, 0
        %v1121 = vcombine.high %v1119, 0
        %v1124 = vunpack.c.l.s4 1983009808
        %v1125 = vunpack.c.0.s8 %v1124
        %v1126 = vlaneseq
        %v1127 = vshrl.u32 %v1126, 7
        %v1128 = vsub.s32 %v1125, %v1127
        %v1129 = vrot.slane %v1081, %v1128
        %v1132 = vunpack.c.l.s4 1983009808
        %v1133 = vunpack.c.0.s8 %v1132
        %v1134 = vlaneseq
        %v1135 = vshrl.u32 %v1134, 7
        %v1136 = vsub.s32 %v1133, %v1135
        %v1137 = vrot.slane %v1087, %v1136
        %v1138 = vcombine.low %v1129, %v1137
        %v1139 = vcombine.high %v1129, %v1137
        %v1141 = vunpack.c.l.s4 1934713408
        %v1142 = vunpack.c.0.s8 %v1141
        %v1143 = vlaneseq
        %v1144 = vshrl.u32 %v1143, 7
        %v1145 = vsub.s32 %v1142, %v1144
        %v1146 = vrot.slane %v1138, %v1145
        %v1148 = vunpack.c.l.s4 1934713408
        %v1149 = vunpack.c.0.s8 %v1148
        %v1150 = vlaneseq
        %v1151 = vshrl.u32 %v1150, 7
        %v1152 = vsub.s32 %v1149, %v1151
        %v1153 = vrot.slane %v1139, %v1152
        %v1154 = vcombine.high %v1146, 0
        %v1155 = vcombine.high %v1153, 0
        %v1156 = vcombine.low %v1112, %v1119
        %v1158 = vunpack.c.l.s4 1983009808
        %v1159 = vunpack.c.0.s8 %v1158
        %v1160 = vlaneseq
        %v1161 = vshrl.u32 %v1160, 7
        %v1162 = vsub.s32 %v1159, %v1161
        %v1163 = vrot.slane %v1156, %v1162
        %v1164 = vcombine.low %v1120, %v1121
        %v1166 = vunpack.c.l.s4 1983009808
        %v1167 = vunpack.c.0.s8 %v1166
        %v1168 = vlaneseq
        %v1169 = vshrl.u32 %v1168, 7
        %v1170 = vsub.s32 %v1167, %v1169
        %v1171 = vrot.slane %v1164, %v1170
        %v1172 = vcombine.low %v1163, %v1171
        %v1174 = vunpack.c.l.s4 1934713408
        %v1175 = vunpack.c.0.s8 %v1174
        %v1176 = vlaneseq
        %v1177 = vshrl.u32 %v1176, 7
        %v1178 = vsub.s32 %v1175, %v1177
        %v1179 = vrot.slane %v1172, %v1178
        %v1180 = vcombine.high %v1179, 0
        %v1181 = vcombine.low %v1146, %v1153
        %v1183 = vunpack.c.l.s4 1983009808
        %v1184 = vunpack.c.0.s8 %v1183
        %v1185 = vlaneseq
        %v1186 = vshrl.u32 %v1185, 7
        %v1187 = vsub.s32 %v1184, %v1186
        %v1188 = vrot.slane %v1181, %v1187
        %v1189 = vcombine.low %v1154, %v1155
        %v1191 = vunpack.c.l.s4 1983009808
        %v1192 = vunpack.c.0.s8 %v1191
        %v1193 = vlaneseq
        %v1194 = vshrl.u32 %v1193, 7
        %v1195 = vsub.s32 %v1192, %v1194
        %v1196 = vrot.slane %v1189, %v1195
        %v1197 = vcombine.low %v1188, %v1196
        %v1199 = vunpack.c.l.s4 1934713408
        %v1200 = vunpack.c.0.s8 %v1199
        %v1201 = vlaneseq
        %v1202 = vshrl.u32 %v1201, 7
        %v1203 = vsub.s32 %v1200, %v1202
        %v1204 = vrot.slane %v1197, %v1203
        %v1205 = vcombine.high %v1204, 0
        %v1208 = vpack.i.b16 %v1204, %v1179
        %v1209 = vshrl.u32 %v1179, 16
        %v1210 = vshrl.u32 %v1204, 16
        %v1211 = vpack.i.b16 %v1210, %v1209
        %v1214 = vpack.i.b16 %v1205, %v1180
        %v1215 = vshrl.u32 %v1180, 16
        %v1216 = vshrl.u32 %v1205, 16
        %v1217 = vpack.i.b16 %v1216, %v1215
        %v1219 = vlaneseq
        %v1220 = vshrl.u32 %v1219, 7
        %v1221 = vsub.s32 0, %v1220
        %v1222 = vrot.slane %v763, %v1221
        %vm1224 = vcmask 64512
        %v1226 = vsel %vm1224, %v908, 0
        %v1229 = vsel %vm1224, %v1058, 0
        %1231 = vmatprep.subr.bf16.mxu0 0
        %1232 = vmatpush1.bf16.xpose.msra.mxu0 0
        %1233 = vmatprep.subr.bf16.mxu0 0
        %1234 = vmatpush1.bf16.xpose.msra.mxu0 0
        %1235 = vmatprep.subr.bf16.mxu0 0
        %1236 = vmatpush1.bf16.xpose.msra.mxu0 0
        %1237 = vmatprep.subr.bf16.mxu0 0
        %1238 = vmatpush1.bf16.xpose.msra.mxu0 0
        %1239 = vmatprep.subr.bf16.mxu0 0
        %1240 = vmatpush1.bf16.xpose.msra.mxu0 0
        %1241 = vmatprep.subr.bf16.mxu0 0
        %1242 = vmatpush1.bf16.xpose.msra.mxu0 0
        %1243 = vmatprep.subr.bf16.mxu0 0
        %1244 = vmatpush1.bf16.xpose.msra.mxu0 0
        %1245 = vmatprep.subr.bf16.mxu0 0
        %1246 = vmatpush1.bf16.xpose.msra.mxu0 %v1229
        %1247 = vmatprep.subr.bf16.mxu0 0
        %1248 = vmatpush2.bf16.xpose.msra.mxu0 0
        %1249 = vmatprep.subr.bf16.mxu0 0
        %1250 = vmatpush2.bf16.xpose.msra.mxu0 0
        %1251 = vmatprep.subr.bf16.mxu0 0
        %1252 = vmatpush2.bf16.xpose.msra.mxu0 0
        %1253 = vmatprep.subr.bf16.mxu0 0
        %1254 = vmatpush2.bf16.xpose.msra.mxu0 0
        %1255 = vmatprep.subr.bf16.mxu0 0
        %1256 = vmatpush2.bf16.xpose.msra.mxu0 0
        %1257 = vmatprep.subr.bf16.mxu0 0
        %1258 = vmatpush2.bf16.xpose.msra.mxu0 0
        %1259 = vmatprep.subr.bf16.mxu0 0
        %1260 = vmatpush2.bf16.xpose.msra.mxu0 0
        %1261 = vmatprep.subr.bf16.mxu0 0
        %1262 = vmatpush2.bf16.xpose.msra.mxu0 0
        %1263 = vmatprep.mubr.bf16.mxu0 0
        %1264 = vmatmul.mubr.bf16.gmra.mxu0 %v1226
        %v1265 = vpop.f32.mrf.mxu0
        %v1266 = vadd.f32 %v1222, %v1265
        %v1267 = vpop.f32.mrf.mxu0
        %v1268 = vpop.f32.mrf.mxu0
        %v1269 = vpop.f32.mrf.mxu0
        %1270 = vdwg.mxu0
        %v1272 = vsel %vm1224, %v911, 0
        %v1275 = vsel %vm1224, %v1061, 0
        %1277 = vmatprep.subr.bf16.mxu0 0
        %1278 = vmatpush1.bf16.xpose.msra.mxu0 0
        %1279 = vmatprep.subr.bf16.mxu0 0
        %1280 = vmatpush1.bf16.xpose.msra.mxu0 0
        %1281 = vmatprep.subr.bf16.mxu0 0
        %1282 = vmatpush1.bf16.xpose.msra.mxu0 0
        %1283 = vmatprep.subr.bf16.mxu0 0
        %1284 = vmatpush1.bf16.xpose.msra.mxu0 0
        %1285 = vmatprep.subr.bf16.mxu0 0
        %1286 = vmatpush1.bf16.xpose.msra.mxu0 0
        %1287 = vmatprep.subr.bf16.mxu0 0
        %1288 = vmatpush1.bf16.xpose.msra.mxu0 0
        %1289 = vmatprep.subr.bf16.mxu0 0
        %1290 = vmatpush1.bf16.xpose.msra.mxu0 0
        %1291 = vmatprep.subr.bf16.mxu0 0
        %1292 = vmatpush1.bf16.xpose.msra.mxu0 %v1275
        %1293 = vmatprep.subr.bf16.mxu0 0
        %1294 = vmatpush2.bf16.xpose.msra.mxu0 0
        %1295 = vmatprep.subr.bf16.mxu0 0
        %1296 = vmatpush2.bf16.xpose.msra.mxu0 0
        %1297 = vmatprep.subr.bf16.mxu0 0
        %1298 = vmatpush2.bf16.xpose.msra.mxu0 0
        %1299 = vmatprep.subr.bf16.mxu0 0
        %1300 = vmatpush2.bf16.xpose.msra.mxu0 0
        %1301 = vmatprep.subr.bf16.mxu0 0
        %1302 = vmatpush2.bf16.xpose.msra.mxu0 0
        %1303 = vmatprep.subr.bf16.mxu0 0
        %1304 = vmatpush2.bf16.xpose.msra.mxu0 0
        %1305 = vmatprep.subr.bf16.mxu0 0
        %1306 = vmatpush2.bf16.xpose.msra.mxu0 0
        %1307 = vmatprep.subr.bf16.mxu0 0
        %1308 = vmatpush2.bf16.xpose.msra.mxu0 0
        %1309 = vmatprep.mubr.bf16.mxu0 0
        %1310 = vmatmul.mubr.bf16.gmra.mxu0 %v1272
        %v1311 = vpop.f32.mrf.mxu0
        %v1312 = vadd.f32 %v1222, %v1311
        %v1313 = vpop.f32.mrf.mxu0
        %v1314 = vpop.f32.mrf.mxu0
        %v1315 = vpop.f32.mrf.mxu0
        %1316 = vdwg.mxu0
        %v1318 = vsel %vm1224, %v914, 0
        %v1321 = vsel %vm1224, %v1064, 0
        %1323 = vmatprep.subr.bf16.mxu0 0
        %1324 = vmatpush1.bf16.xpose.msra.mxu0 0
        %1325 = vmatprep.subr.bf16.mxu0 0
        %1326 = vmatpush1.bf16.xpose.msra.mxu0 0
        %1327 = vmatprep.subr.bf16.mxu0 0
        %1328 = vmatpush1.bf16.xpose.msra.mxu0 0
        %1329 = vmatprep.subr.bf16.mxu0 0
        %1330 = vmatpush1.bf16.xpose.msra.mxu0 0
        %1331 = vmatprep.subr.bf16.mxu0 0
        %1332 = vmatpush1.bf16.xpose.msra.mxu0 0
        %1333 = vmatprep.subr.bf16.mxu0 0
        %1334 = vmatpush1.bf16.xpose.msra.mxu0 0
        %1335 = vmatprep.subr.bf16.mxu0 0
        %1336 = vmatpush1.bf16.xpose.msra.mxu0 0
        %1337 = vmatprep.subr.bf16.mxu0 0
        %1338 = vmatpush1.bf16.xpose.msra.mxu0 %v1321
        %1339 = vmatprep.subr.bf16.mxu0 0
        %1340 = vmatpush2.bf16.xpose.msra.mxu0 0
        %1341 = vmatprep.subr.bf16.mxu0 0
        %1342 = vmatpush2.bf16.xpose.msra.mxu0 0
        %1343 = vmatprep.subr.bf16.mxu0 0
        %1344 = vmatpush2.bf16.xpose.msra.mxu0 0
        %1345 = vmatprep.subr.bf16.mxu0 0
        %1346 = vmatpush2.bf16.xpose.msra.mxu0 0
        %1347 = vmatprep.subr.bf16.mxu0 0
        %1348 = vmatpush2.bf16.xpose.msra.mxu0 0
        %1349 = vmatprep.subr.bf16.mxu0 0
        %1350 = vmatpush2.bf16.xpose.msra.mxu0 0
        %1351 = vmatprep.subr.bf16.mxu0 0
        %1352 = vmatpush2.bf16.xpose.msra.mxu0 0
        %1353 = vmatprep.subr.bf16.mxu0 0
        %1354 = vmatpush2.bf16.xpose.msra.mxu0 0
        %1355 = vmatprep.mubr.bf16.mxu0 0
        %1356 = vmatmul.mubr.bf16.gmra.mxu0 %v1318
        %v1357 = vpop.f32.mrf.mxu0
        %v1358 = vadd.f32 %v1222, %v1357
        %v1359 = vpop.f32.mrf.mxu0
        %v1360 = vpop.f32.mrf.mxu0
        %v1361 = vpop.f32.mrf.mxu0
        %1362 = vdwg.mxu0
        %v1364 = vsel %vm1224, %v917, 0
        %v1367 = vsel %vm1224, %v1067, 0
        %1369 = vmatprep.subr.bf16.mxu0 0
        %1370 = vmatpush1.bf16.xpose.msra.mxu0 0
        %1371 = vmatprep.subr.bf16.mxu0 0
        %1372 = vmatpush1.bf16.xpose.msra.mxu0 0
        %1373 = vmatprep.subr.bf16.mxu0 0
        %1374 = vmatpush1.bf16.xpose.msra.mxu0 0
        %1375 = vmatprep.subr.bf16.mxu0 0
        %1376 = vmatpush1.bf16.xpose.msra.mxu0 0
        %1377 = vmatprep.subr.bf16.mxu0 0
        %1378 = vmatpush1.bf16.xpose.msra.mxu0 0
        %1379 = vmatprep.subr.bf16.mxu0 0
        %1380 = vmatpush1.bf16.xpose.msra.mxu0 0
        %1381 = vmatprep.subr.bf16.mxu0 0
        %1382 = vmatpush1.bf16.xpose.msra.mxu0 0
        %1383 = vmatprep.subr.bf16.mxu0 0
        %1384 = vmatpush1.bf16.xpose.msra.mxu0 %v1367
        %1385 = vmatprep.subr.bf16.mxu0 0
        %1386 = vmatpush2.bf16.xpose.msra.mxu0 0
        %1387 = vmatprep.subr.bf16.mxu0 0
        %1388 = vmatpush2.bf16.xpose.msra.mxu0 0
        %1389 = vmatprep.subr.bf16.mxu0 0
        %1390 = vmatpush2.bf16.xpose.msra.mxu0 0
        %1391 = vmatprep.subr.bf16.mxu0 0
        %1392 = vmatpush2.bf16.xpose.msra.mxu0 0
        %1393 = vmatprep.subr.bf16.mxu0 0
        %1394 = vmatpush2.bf16.xpose.msra.mxu0 0
        %1395 = vmatprep.subr.bf16.mxu0 0
        %1396 = vmatpush2.bf16.xpose.msra.mxu0 0
        %1397 = vmatprep.subr.bf16.mxu0 0
        %1398 = vmatpush2.bf16.xpose.msra.mxu0 0
        %1399 = vmatprep.subr.bf16.mxu0 0
        %1400 = vmatpush2.bf16.xpose.msra.mxu0 0
        %1401 = vmatprep.mubr.bf16.mxu0 0
        %1402 = vmatmul.mubr.bf16.gmra.mxu0 %v1364
        %v1403 = vpop.f32.mrf.mxu0
        %v1404 = vadd.f32 %v1222, %v1403
        %v1405 = vpop.f32.mrf.mxu0
        %v1406 = vpop.f32.mrf.mxu0
        %v1407 = vpop.f32.mrf.mxu0
        %1408 = vdwg.mxu0
        %v1409 = vsel %vm1224, %v1266, -inf
        %1410 = vmax.xlane.f32.xlu0 %v1409
        %v1411 = vpop.xlane.xlu0 %1410
        %v1412 = vsel %vm1224, %v1312, -inf
        %1413 = vmax.xlane.f32.xlu0 %v1412
        %v1414 = vpop.xlane.xlu0 %1413
        %v1415 = vsel %vm1224, %v1358, -inf
        %1416 = vmax.xlane.f32.xlu0 %v1415
        %v1417 = vpop.xlane.xlu0 %1416
        %v1418 = vsel %vm1224, %v1404, -inf
        %1419 = vmax.xlane.f32.xlu0 %v1418
        %v1420 = vpop.xlane.xlu0 %1419
        %v1421 = vsub.f32 %v1266, %v1411
        %v1422 = vsub.f32 %v1312, %v1414
        %v1423 = vsub.f32 %v1358, %v1417
        %v1424 = vsub.f32 %v1404, %v1420
        %v1425 = vmul.f32 %v1421, 1.442695
        %v1426 = vpow.pop %v1425
        %v1427 = vmul.f32 %v1422, 1.442695
        %v1428 = vpow.pop %v1427
        %v1429 = vmul.f32 %v1423, 1.442695
        %v1430 = vpow.pop %v1429
        %v1431 = vmul.f32 %v1424, 1.442695
        %v1432 = vpow.pop %v1431
        %v1433 = vsel %vm1224, %v1426, 0.0
        %1434 = vadd.xlane.f32.xlu0 %v1433
        %v1435 = vpop.xlane.xlu0 %1434
        %v1436 = vsel %vm1224, %v1428, 0.0
        %1437 = vadd.xlane.f32.xlu0 %v1436
        %v1438 = vpop.xlane.xlu0 %1437
        %v1439 = vsel %vm1224, %v1430, 0.0
        %1440 = vadd.xlane.f32.xlu0 %v1439
        %v1441 = vpop.xlane.xlu0 %1440
        %v1442 = vsel %vm1224, %v1432, 0.0
        %1443 = vadd.xlane.f32.xlu0 %v1442
        %v1444 = vpop.xlane.xlu0 %1443
        %v1445 = vpack.c.bf16 %v1426, %v1426
        %v1446 = vpack.c.bf16 %v1428, %v1428
        %v1447 = vpack.c.bf16 %v1430, %v1430
        %v1448 = vpack.c.bf16 %v1432, %v1432
        %v1450 = vsel %vm1224, %v1445, 0
        %vm1452 = vcmask 1043456
        %v1454 = vsel %vm1452, %v1208, 0
        %1456 = vmatprep.subr.bf16.mxu0 0
        %1457 = vmatpush1.bf16.msra.mxu0 0
        %1458 = vmatprep.subr.bf16.mxu0 0
        %1459 = vmatpush1.bf16.msra.mxu0 0
        %1460 = vmatprep.subr.bf16.mxu0 0
        %1461 = vmatpush1.bf16.msra.mxu0 0
        %1462 = vmatprep.subr.bf16.mxu0 0
        %1463 = vmatpush1.bf16.msra.mxu0 0
        %1464 = vmatprep.subr.bf16.mxu0 0
        %1465 = vmatpush1.bf16.msra.mxu0 0
        %1466 = vmatprep.subr.bf16.mxu0 0
        %1467 = vmatpush1.bf16.msra.mxu0 0
        %1468 = vmatprep.subr.bf16.mxu0 0
        %1469 = vmatpush1.bf16.msra.mxu0 0
        %1470 = vmatprep.subr.bf16.mxu0 0
        %1471 = vmatpush1.bf16.msra.mxu0 %v1454
        %1472 = vmatprep.subr.bf16.mxu0 0
        %1473 = vmatpush2.bf16.msra.mxu0 0
        %1474 = vmatprep.subr.bf16.mxu0 0
        %1475 = vmatpush2.bf16.msra.mxu0 0
        %1476 = vmatprep.subr.bf16.mxu0 0
        %1477 = vmatpush2.bf16.msra.mxu0 0
        %1478 = vmatprep.subr.bf16.mxu0 0
        %1479 = vmatpush2.bf16.msra.mxu0 0
        %1480 = vmatprep.subr.bf16.mxu0 0
        %1481 = vmatpush2.bf16.msra.mxu0 0
        %1482 = vmatprep.subr.bf16.mxu0 0
        %1483 = vmatpush2.bf16.msra.mxu0 0
        %1484 = vmatprep.subr.bf16.mxu0 0
        %1485 = vmatpush2.bf16.msra.mxu0 0
        %1486 = vmatprep.subr.bf16.mxu0 0
        %1487 = vmatpush2.bf16.msra.mxu0 0
        %1488 = vmatprep.mubr.bf16.mxu0 0
        %1489 = vmatmul.mubr.bf16.gmra.mxu0 %v1450
        %v1490 = vpop.f32.mrf.mxu0
        %v1491 = vadd.f32 0.0, %v1490
        %v1492 = vpop.f32.mrf.mxu0
        %v1493 = vpop.f32.mrf.mxu0
        %v1494 = vpop.f32.mrf.mxu0
        %1495 = vdwg.mxu0
        %v1497 = vsel %vm1224, %v1446, 0
        %v1500 = vsel %vm1452, %v1211, 0
        %1502 = vmatprep.subr.bf16.mxu0 0
        %1503 = vmatpush1.bf16.msra.mxu0 0
        %1504 = vmatprep.subr.bf16.mxu0 0
        %1505 = vmatpush1.bf16.msra.mxu0 0
        %1506 = vmatprep.subr.bf16.mxu0 0
        %1507 = vmatpush1.bf16.msra.mxu0 0
        %1508 = vmatprep.subr.bf16.mxu0 0
        %1509 = vmatpush1.bf16.msra.mxu0 0
        %1510 = vmatprep.subr.bf16.mxu0 0
        %1511 = vmatpush1.bf16.msra.mxu0 0
        %1512 = vmatprep.subr.bf16.mxu0 0
        %1513 = vmatpush1.bf16.msra.mxu0 0
        %1514 = vmatprep.subr.bf16.mxu0 0
        %1515 = vmatpush1.bf16.msra.mxu0 0
        %1516 = vmatprep.subr.bf16.mxu0 0
        %1517 = vmatpush1.bf16.msra.mxu0 %v1500
        %1518 = vmatprep.subr.bf16.mxu0 0
        %1519 = vmatpush2.bf16.msra.mxu0 0
        %1520 = vmatprep.subr.bf16.mxu0 0
        %1521 = vmatpush2.bf16.msra.mxu0 0
        %1522 = vmatprep.subr.bf16.mxu0 0
        %1523 = vmatpush2.bf16.msra.mxu0 0
        %1524 = vmatprep.subr.bf16.mxu0 0
        %1525 = vmatpush2.bf16.msra.mxu0 0
        %1526 = vmatprep.subr.bf16.mxu0 0
        %1527 = vmatpush2.bf16.msra.mxu0 0
        %1528 = vmatprep.subr.bf16.mxu0 0
        %1529 = vmatpush2.bf16.msra.mxu0 0
        %1530 = vmatprep.subr.bf16.mxu0 0
        %1531 = vmatpush2.bf16.msra.mxu0 0
        %1532 = vmatprep.subr.bf16.mxu0 0
        %1533 = vmatpush2.bf16.msra.mxu0 0
        %1534 = vmatprep.mubr.bf16.mxu0 0
        %1535 = vmatmul.mubr.bf16.gmra.mxu0 %v1497
        %v1536 = vpop.f32.mrf.mxu0
        %v1537 = vadd.f32 0.0, %v1536
        %v1538 = vpop.f32.mrf.mxu0
        %v1539 = vpop.f32.mrf.mxu0
        %v1540 = vpop.f32.mrf.mxu0
        %1541 = vdwg.mxu0
        %v1543 = vsel %vm1224, %v1447, 0
        %v1546 = vsel %vm1452, %v1214, 0
        %1548 = vmatprep.subr.bf16.mxu0 0
        %1549 = vmatpush1.bf16.msra.mxu0 0
        %1550 = vmatprep.subr.bf16.mxu0 0
        %1551 = vmatpush1.bf16.msra.mxu0 0
        %1552 = vmatprep.subr.bf16.mxu0 0
        %1553 = vmatpush1.bf16.msra.mxu0 0
        %1554 = vmatprep.subr.bf16.mxu0 0
        %1555 = vmatpush1.bf16.msra.mxu0 0
        %1556 = vmatprep.subr.bf16.mxu0 0
        %1557 = vmatpush1.bf16.msra.mxu0 0
        %1558 = vmatprep.subr.bf16.mxu0 0
        %1559 = vmatpush1.bf16.msra.mxu0 0
        %1560 = vmatprep.subr.bf16.mxu0 0
        %1561 = vmatpush1.bf16.msra.mxu0 0
        %1562 = vmatprep.subr.bf16.mxu0 0
        %1563 = vmatpush1.bf16.msra.mxu0 %v1546
        %1564 = vmatprep.subr.bf16.mxu0 0
        %1565 = vmatpush2.bf16.msra.mxu0 0
        %1566 = vmatprep.subr.bf16.mxu0 0
        %1567 = vmatpush2.bf16.msra.mxu0 0
        %1568 = vmatprep.subr.bf16.mxu0 0
        %1569 = vmatpush2.bf16.msra.mxu0 0
        %1570 = vmatprep.subr.bf16.mxu0 0
        %1571 = vmatpush2.bf16.msra.mxu0 0
        %1572 = vmatprep.subr.bf16.mxu0 0
        %1573 = vmatpush2.bf16.msra.mxu0 0
        %1574 = vmatprep.subr.bf16.mxu0 0
        %1575 = vmatpush2.bf16.msra.mxu0 0
        %1576 = vmatprep.subr.bf16.mxu0 0
        %1577 = vmatpush2.bf16.msra.mxu0 0
        %1578 = vmatprep.subr.bf16.mxu0 0
        %1579 = vmatpush2.bf16.msra.mxu0 0
        %1580 = vmatprep.mubr.bf16.mxu0 0
        %1581 = vmatmul.mubr.bf16.gmra.mxu0 %v1543
        %v1582 = vpop.f32.mrf.mxu0
        %v1583 = vadd.f32 0.0, %v1582
        %v1584 = vpop.f32.mrf.mxu0
        %v1585 = vpop.f32.mrf.mxu0
        %v1586 = vpop.f32.mrf.mxu0
        %1587 = vdwg.mxu0
        %v1589 = vsel %vm1224, %v1448, 0
        %v1592 = vsel %vm1452, %v1217, 0
        %1594 = vmatprep.subr.bf16.mxu0 0
        %1595 = vmatpush1.bf16.msra.mxu0 0
        %1596 = vmatprep.subr.bf16.mxu0 0
        %1597 = vmatpush1.bf16.msra.mxu0 0
        %1598 = vmatprep.subr.bf16.mxu0 0
        %1599 = vmatpush1.bf16.msra.mxu0 0
        %1600 = vmatprep.subr.bf16.mxu0 0
        %1601 = vmatpush1.bf16.msra.mxu0 0
        %1602 = vmatprep.subr.bf16.mxu0 0
        %1603 = vmatpush1.bf16.msra.mxu0 0
        %1604 = vmatprep.subr.bf16.mxu0 0
        %1605 = vmatpush1.bf16.msra.mxu0 0
        %1606 = vmatprep.subr.bf16.mxu0 0
        %1607 = vmatpush1.bf16.msra.mxu0 0
        %1608 = vmatprep.subr.bf16.mxu0 0
        %1609 = vmatpush1.bf16.msra.mxu0 %v1592
        %1610 = vmatprep.subr.bf16.mxu0 0
        %1611 = vmatpush2.bf16.msra.mxu0 0
        %1612 = vmatprep.subr.bf16.mxu0 0
        %1613 = vmatpush2.bf16.msra.mxu0 0
        %1614 = vmatprep.subr.bf16.mxu0 0
        %1615 = vmatpush2.bf16.msra.mxu0 0
        %1616 = vmatprep.subr.bf16.mxu0 0
        %1617 = vmatpush2.bf16.msra.mxu0 0
        %1618 = vmatprep.subr.bf16.mxu0 0
        %1619 = vmatpush2.bf16.msra.mxu0 0
        %1620 = vmatprep.subr.bf16.mxu0 0
        %1621 = vmatpush2.bf16.msra.mxu0 0
        %1622 = vmatprep.subr.bf16.mxu0 0
        %1623 = vmatpush2.bf16.msra.mxu0 0
        %1624 = vmatprep.subr.bf16.mxu0 0
        %1625 = vmatpush2.bf16.msra.mxu0 0
        %1626 = vmatprep.mubr.bf16.mxu0 0
        %1627 = vmatmul.mubr.bf16.gmra.mxu0 %v1589
        %v1628 = vpop.f32.mrf.mxu0
        %v1629 = vadd.f32 0.0, %v1628
        %v1630 = vpop.f32.mrf.mxu0
        %v1631 = vpop.f32.mrf.mxu0
        %v1632 = vpop.f32.mrf.mxu0
        %1633 = vdwg.mxu0
        %v1634 = vrcp.pop %v1435
        %v1635 = vrcp.pop %v1438
        %v1636 = vrcp.pop %v1441
        %v1637 = vrcp.pop %v1444
        %v1638 = vmul.f32 %v1491, %v1634
        %v1639 = vmul.f32 %v1537, %v1635
        %v1640 = vmul.f32 %v1583, %v1636
        %v1641 = vmul.f32 %v1629, %v1637
        %v1642 = vcombine.low %v1638, %v1640
        %v1643 = vcombine.high %v1638, %v1640
        %v1645 = vunpack.c.l.s4 1983009808
        %v1646 = vunpack.c.0.s8 %v1645
        %v1647 = vlaneseq
        %v1648 = vshrl.u32 %v1647, 7
        %v1649 = vsub.s32 %v1646, %v1648
        %v1650 = vrot.slane %v1642, %v1649
        %v1652 = vunpack.c.l.s4 1983009808
        %v1653 = vunpack.c.0.s8 %v1652
        %v1654 = vlaneseq
        %v1655 = vshrl.u32 %v1654, 7
        %v1656 = vsub.s32 %v1653, %v1655
        %v1657 = vrot.slane %v1643, %v1656
        %v1658 = vcombine.low %v1639, %v1641
        %v1659 = vcombine.high %v1639, %v1641
        %v1661 = vunpack.c.l.s4 1983009808
        %v1662 = vunpack.c.0.s8 %v1661
        %v1663 = vlaneseq
        %v1664 = vshrl.u32 %v1663, 7
        %v1665 = vsub.s32 %v1662, %v1664
        %v1666 = vrot.slane %v1658, %v1665
        %v1668 = vunpack.c.l.s4 1983009808
        %v1669 = vunpack.c.0.s8 %v1668
        %v1670 = vlaneseq
        %v1671 = vshrl.u32 %v1670, 7
        %v1672 = vsub.s32 %v1669, %v1671
        %v1673 = vrot.slane %v1659, %v1672
        %v1674 = vcombine.low %v1650, %v1666
        %v1675 = vcombine.high %v1650, %v1666
        %v1677 = vunpack.c.l.s4 1934713408
        %v1678 = vunpack.c.0.s8 %v1677
        %v1679 = vlaneseq
        %v1680 = vshrl.u32 %v1679, 7
        %v1681 = vsub.s32 %v1678, %v1680
        %v1682 = vrot.slane %v1674, %v1681
        %v1684 = vunpack.c.l.s4 1934713408
        %v1685 = vunpack.c.0.s8 %v1684
        %v1686 = vlaneseq
        %v1687 = vshrl.u32 %v1686, 7
        %v1688 = vsub.s32 %v1685, %v1687
        %v1689 = vrot.slane %v1675, %v1688
        %v1690 = vcombine.low %v1657, %v1673
        %v1691 = vcombine.high %v1657, %v1673
        %v1693 = vunpack.c.l.s4 1934713408
        %v1694 = vunpack.c.0.s8 %v1693
        %v1695 = vlaneseq
        %v1696 = vshrl.u32 %v1695, 7
        %v1697 = vsub.s32 %v1694, %v1696
        %v1698 = vrot.slane %v1690, %v1697
        %v1700 = vunpack.c.l.s4 1934713408
        %v1701 = vunpack.c.0.s8 %v1700
        %v1702 = vlaneseq
        %v1703 = vshrl.u32 %v1702, 7
        %v1704 = vsub.s32 %v1701, %v1703
        %v1705 = vrot.slane %v1691, %v1704
        %v1706 = vcombine.high %v1682, 0.0
        %v1707 = vcombine.high %v1689, 0.0
        %v1708 = vcombine.high %v1698, 0.0
        %v1709 = vcombine.high %v1705, 0.0
        %v1710 = vcombine.low %v1682, %v1689
        %v1712 = vunpack.c.l.s4 1983009808
        %v1713 = vunpack.c.0.s8 %v1712
        %v1714 = vlaneseq
        %v1715 = vshrl.u32 %v1714, 7
        %v1716 = vsub.s32 %v1713, %v1715
        %v1717 = vrot.slane %v1710, %v1716
        %v1718 = vcombine.low %v1706, %v1707
        %v1720 = vunpack.c.l.s4 1983009808
        %v1721 = vunpack.c.0.s8 %v1720
        %v1722 = vlaneseq
        %v1723 = vshrl.u32 %v1722, 7
        %v1724 = vsub.s32 %v1721, %v1723
        %v1725 = vrot.slane %v1718, %v1724
        %v1726 = vcombine.low %v1698, %v1705
        %v1728 = vunpack.c.l.s4 1983009808
        %v1729 = vunpack.c.0.s8 %v1728
        %v1730 = vlaneseq
        %v1731 = vshrl.u32 %v1730, 7
        %v1732 = vsub.s32 %v1729, %v1731
        %v1733 = vrot.slane %v1726, %v1732
        %v1734 = vcombine.low %v1708, %v1709
        %v1736 = vunpack.c.l.s4 1983009808
        %v1737 = vunpack.c.0.s8 %v1736
        %v1738 = vlaneseq
        %v1739 = vshrl.u32 %v1738, 7
        %v1740 = vsub.s32 %v1737, %v1739
        %v1741 = vrot.slane %v1734, %v1740
        %v1742 = vcombine.low %v1717, %v1725
        %v1743 = vcombine.high %v1717, %v1725
        %v1745 = vunpack.c.l.s4 1934713408
        %v1746 = vunpack.c.0.s8 %v1745
        %v1747 = vlaneseq
        %v1748 = vshrl.u32 %v1747, 7
        %v1749 = vsub.s32 %v1746, %v1748
        %v1750 = vrot.slane %v1742, %v1749
        %v1752 = vunpack.c.l.s4 1934713408
        %v1753 = vunpack.c.0.s8 %v1752
        %v1754 = vlaneseq
        %v1755 = vshrl.u32 %v1754, 7
        %v1756 = vsub.s32 %v1753, %v1755
        %v1757 = vrot.slane %v1743, %v1756
        %v1758 = vcombine.low %v1733, %v1741
        %v1759 = vcombine.high %v1733, %v1741
        %v1761 = vunpack.c.l.s4 1934713408
        %v1762 = vunpack.c.0.s8 %v1761
        %v1763 = vlaneseq
        %v1764 = vshrl.u32 %v1763, 7
        %v1765 = vsub.s32 %v1762, %v1764
        %v1766 = vrot.slane %v1758, %v1765
        %v1768 = vunpack.c.l.s4 1934713408
        %v1769 = vunpack.c.0.s8 %v1768
        %v1770 = vlaneseq
        %v1771 = vshrl.u32 %v1770, 7
        %v1772 = vsub.s32 %v1769, %v1771
        %v1773 = vrot.slane %v1759, %v1772
        %v1774 = vcombine.low %v1750, %v1766
        %v1775 = vcombine.high %v1750, %v1766
        %v1776 = vcombine.low %v1757, %v1773
        %v1777 = vcombine.high %v1757, %v1773
        %1779 = vrot.lane.b32.xlu0 %v1775, 8
        %v1780 = vpop.permute.xlu0 %1779
        %1783 = vrot.lane.b32.xlu0 %v1776, 16
        %v1784 = vpop.permute.xlu0 %1783
        %1787 = vrot.lane.b32.xlu0 %v1777, 24
        %v1788 = vpop.permute.xlu0 %1787
        %v1790 = vsel %vm1224, %v1774, %v1780
        %vm1791 = vcmask 130048
        %v1792 = vsel %vm1791, %v1790, %v1784
        %vm1793 = vcmask 195584
        %v1794 = vsel %vm1793, %v1792, %v1788
        %v1795 = vpack.c.bf16 %v1794, %v1794
        %v1796 = vld [vmem:[%s6] sm:$0xf]
        %v1797 = vld [vmem:[%s6 + $0x4] sm:$0xf]
        %v1798 = vld [vmem:[%s6 + $0x8] sm:$0xf]
        %v1799 = vld [vmem:[%s6 + $0xc] sm:$0xf]
        %v1800 = vld [vmem:[#allocation13] sm:$0x1]
        %v1802 = vlaneseq
        %v1803 = vshrl.u32 %v1802, 7
        %v1804 = vsub.s32 0, %v1803
        %v1805 = vrot.slane %v1800, %v1804
        %v1811 = vunpack.c.l.b16 %v1796
        %v1812 = vunpack.c.l.b16 %v1797
        %v1813 = vunpack.c.l.b16 %v1798
        %v1814 = vunpack.c.l.b16 %v1799
        %v1815 = vpack.c.b16 %v1812, %v1811
        %v1816 = vpack.c.b16 %v1814, %v1813
        %vm1819 = vcmask 261120
        %v1821 = vsel %vm1819, %v1795, 0
        %1823 = vmatprep.subr.bf16.mxu0 0
        %1824 = vmatpush1.bf16.msra.mxu0 0
        %1825 = vmatprep.subr.bf16.mxu0 0
        %1826 = vmatpush1.bf16.msra.mxu0 0
        %1827 = vmatprep.subr.bf16.mxu0 0
        %1828 = vmatpush1.bf16.msra.mxu0 0
        %1829 = vmatprep.subr.bf16.mxu0 0
        %1830 = vmatpush1.bf16.msra.mxu0 0
        %1831 = vmatprep.subr.bf16.mxu0 0
        %1832 = vmatpush1.bf16.msra.mxu0 0
        %1833 = vmatprep.subr.bf16.mxu0 0
        %1834 = vmatpush1.bf16.msra.mxu0 0
        %1835 = vmatprep.subr.bf16.mxu0 0
        %1836 = vmatpush1.bf16.msra.mxu0 %v1816
        %1837 = vmatprep.subr.bf16.mxu0 0
        %1838 = vmatpush1.bf16.msra.mxu0 %v1815
        %1839 = vmatprep.subr.bf16.mxu0 0
        %1840 = vmatpush2.bf16.msra.mxu0 0
        %1841 = vmatprep.subr.bf16.mxu0 0
        %1842 = vmatpush2.bf16.msra.mxu0 0
        %1843 = vmatprep.subr.bf16.mxu0 0
        %1844 = vmatpush2.bf16.msra.mxu0 0
        %1845 = vmatprep.subr.bf16.mxu0 0
        %1846 = vmatpush2.bf16.msra.mxu0 0
        %1847 = vmatprep.subr.bf16.mxu0 0
        %1848 = vmatpush2.bf16.msra.mxu0 0
        %1849 = vmatprep.subr.bf16.mxu0 0
        %1850 = vmatpush2.bf16.msra.mxu0 0
        %1851 = vmatprep.subr.bf16.mxu0 0
        %1852 = vmatpush2.bf16.msra.mxu0 0
        %1853 = vmatprep.subr.bf16.mxu0 0
        %1854 = vmatpush2.bf16.msra.mxu0 0
        %1855 = vmatprep.mubr.bf16.mxu0 0
        %1856 = vmatmul.mubr.bf16.gmra.mxu0 %v1821
        %v1857 = vpop.f32.mrf.mxu0
        %v1858 = vadd.f32 %v1805, %v1857
        %v1859 = vpop.f32.mrf.mxu0
        %v1860 = vpop.f32.mrf.mxu0
        %v1861 = vpop.f32.mrf.mxu0
        %1862 = vdwg.mxu0
        %v1863 = vadd.f32 %v1858, %v762
        %v1864 = vld [vmem:[#allocation14] sm:$0x1]
        %v1865 = vld [vmem:[#allocation16] sm:$0x1]
        %v1866 = vsel %vm1819, %v1863, 0.0
        %1867 = vadd.xlane.f32.xlu0 %v1866
        %v1868 = vpop.xlane.xlu0 %1867
        %v1869 = vmul.f32 %v1863, %v1863
        %v1870 = vsel %vm1819, %v1869, 0.0
        %1871 = vadd.xlane.f32.xlu0 %v1870
        %v1872 = vpop.xlane.xlu0 %1871
        %v1873 = vmul.f32 %v1868, 0.03125
        %v1874 = vmul.f32 %v1872, 0.03125
        %v1875 = vmul.f32 %v1873, %v1873
        %v1876 = vsub.f32 %v1874, %v1875
        %v1877 = vmax.f32 %v1876, 0.0
        %v1878 = vsub.f32 %v1863, %v1873
        %v1879 = vadd.f32 %v1877, 1e-06
        %v1880 = vrsqrt.pop %v1879
        %v1881 = vmul.f32 %v1878, %v1880
        %v1883 = vlaneseq
        %v1884 = vshrl.u32 %v1883, 7
        %v1885 = vsub.s32 0, %v1884
        %v1886 = vrot.slane %v1864, %v1885
        %v1888 = vmul.f32 %v1881, %v1886
        %v1890 = vlaneseq
        %v1891 = vshrl.u32 %v1890, 7
        %v1892 = vsub.s32 0, %v1891
        %v1893 = vrot.slane %v1865, %v1892
        %v1895 = vadd.f32 %v1888, %v1893
        %v1896 = vpack.c.bf16 %v1895, %v1895
        %v1897 = vld [vmem:[%s10] sm:$0xf]
        %v1898 = vld [vmem:[%s10 + $0x4] sm:$0xf]
        %v1899 = vld [vmem:[%s10 + $0x8] sm:$0xf]
        %v1900 = vld [vmem:[%s10 + $0xc] sm:$0xf]
        %v1901 = vld [vmem:[%s11] sm:$0x1]
        %v1903 = vlaneseq
        %v1904 = vshrl.u32 %v1903, 7
        %v1905 = vsub.s32 0, %v1904
        %v1906 = vrot.slane %v1901, %v1905
        %v1912 = vunpack.c.l.b16 %v1897
        %v1913 = vunpack.c.l.b16 %v1898
        %v1914 = vunpack.c.l.b16 %v1899
        %v1915 = vunpack.c.l.b16 %v1900
        %v1916 = vpack.c.b16 %v1913, %v1912
        %v1917 = vpack.c.b16 %v1915, %v1914
        %v1921 = vsel %vm1819, %v1896, 0
        %1923 = vmatprep.subr.bf16.mxu0 0
        %1924 = vmatpush1.bf16.msra.mxu0 0
        %1925 = vmatprep.subr.bf16.mxu0 0
        %1926 = vmatpush1.bf16.msra.mxu0 0
        %1927 = vmatprep.subr.bf16.mxu0 0
        %1928 = vmatpush1.bf16.msra.mxu0 0
        %1929 = vmatprep.subr.bf16.mxu0 0
        %1930 = vmatpush1.bf16.msra.mxu0 0
        %1931 = vmatprep.subr.bf16.mxu0 0
        %1932 = vmatpush1.bf16.msra.mxu0 0
        %1933 = vmatprep.subr.bf16.mxu0 0
        %1934 = vmatpush1.bf16.msra.mxu0 0
        %1935 = vmatprep.subr.bf16.mxu0 0
        %1936 = vmatpush1.bf16.msra.mxu0 %v1917
        %1937 = vmatprep.subr.bf16.mxu0 0
        %1938 = vmatpush1.bf16.msra.mxu0 %v1916
        %1939 = vmatprep.subr.bf16.mxu0 0
        %1940 = vmatpush2.bf16.msra.mxu0 0
        %1941 = vmatprep.subr.bf16.mxu0 0
        %1942 = vmatpush2.bf16.msra.mxu0 0
        %1943 = vmatprep.subr.bf16.mxu0 0
        %1944 = vmatpush2.bf16.msra.mxu0 0
        %1945 = vmatprep.subr.bf16.mxu0 0
        %1946 = vmatpush2.bf16.msra.mxu0 0
        %1947 = vmatprep.subr.bf16.mxu0 0
        %1948 = vmatpush2.bf16.msra.mxu0 0
        %1949 = vmatprep.subr.bf16.mxu0 0
        %1950 = vmatpush2.bf16.msra.mxu0 0
        %1951 = vmatprep.subr.bf16.mxu0 0
        %1952 = vmatpush2.bf16.msra.mxu0 0
        %1953 = vmatprep.subr.bf16.mxu0 0
        %1954 = vmatpush2.bf16.msra.mxu0 0
        %1955 = vmatprep.mubr.bf16.mxu0 0
        %1956 = vmatmul.mubr.bf16.gmra.mxu0 %v1921
        %v1957 = vpop.f32.mrf.mxu0
        %v1958 = vadd.f32 %v1906, %v1957
        %v1959 = vpop.f32.mrf.mxu0
        %v1960 = vpop.f32.mrf.mxu0
        %v1961 = vpop.f32.mrf.mxu0
        %1962 = vdwg.mxu0
        %v1963 = vmax.f32 %v1958, 0.0
        %v1964 = vpack.c.bf16 %v1963, %v1963
        %v1965 = vld [vmem:[%s12] sm:$0xf]
        %v1966 = vld [vmem:[%s12 + $0x4] sm:$0xf]
        %v1967 = vld [vmem:[%s12 + $0x8] sm:$0xf]
        %v1968 = vld [vmem:[%s12 + $0xc] sm:$0xf]
        %v1969 = vld [vmem:[%s12 + $0x10] sm:$0xf]
        %v1970 = vld [vmem:[%s12 + $0x14] sm:$0xf]
        %v1971 = vld [vmem:[%s12 + $0x18] sm:$0xf]
        %v1972 = vld [vmem:[%s12 + $0x1c] sm:$0xf]
        %v1973 = vld [vmem:[%s13] sm:$0x1]
        %v1975 = vlaneseq
        %v1976 = vshrl.u32 %v1975, 7
        %v1977 = vsub.s32 0, %v1976
        %v1978 = vrot.slane %v1973, %v1977
        %v1988 = vunpack.c.l.b16 %v1965
        %v1989 = vunpack.c.l.b16 %v1966
        %v1990 = vunpack.c.l.b16 %v1967
        %v1991 = vunpack.c.l.b16 %v1968
        %v1992 = vunpack.c.l.b16 %v1969
        %v1993 = vunpack.c.l.b16 %v1970
        %v1994 = vunpack.c.l.b16 %v1971
        %v1995 = vunpack.c.l.b16 %v1972
        %v1996 = vpack.c.b16 %v1989, %v1988
        %v1997 = vpack.c.b16 %v1991, %v1990
        %v1998 = vpack.c.b16 %v1993, %v1992
        %v1999 = vpack.c.b16 %v1995, %v1994
        %vm2004 = vcmask 523264
        %v2006 = vsel %vm2004, %v1964, 0
        %2008 = vmatprep.subr.bf16.mxu0 0
        %2009 = vmatpush1.bf16.msra.mxu0 0
        %2010 = vmatprep.subr.bf16.mxu0 0
        %2011 = vmatpush1.bf16.msra.mxu0 0
        %2012 = vmatprep.subr.bf16.mxu0 0
        %2013 = vmatpush1.bf16.msra.mxu0 0
        %2014 = vmatprep.subr.bf16.mxu0 0
        %2015 = vmatpush1.bf16.msra.mxu0 0
        %2016 = vmatprep.subr.bf16.mxu0 0
        %2017 = vmatpush1.bf16.msra.mxu0 %v1999
        %2018 = vmatprep.subr.bf16.mxu0 0
        %2019 = vmatpush1.bf16.msra.mxu0 %v1998
        %2020 = vmatprep.subr.bf16.mxu0 0
        %2021 = vmatpush1.bf16.msra.mxu0 %v1997
        %2022 = vmatprep.subr.bf16.mxu0 0
        %2023 = vmatpush1.bf16.msra.mxu0 %v1996
        %2024 = vmatprep.subr.bf16.mxu0 0
        %2025 = vmatpush2.bf16.msra.mxu0 0
        %2026 = vmatprep.subr.bf16.mxu0 0
        %2027 = vmatpush2.bf16.msra.mxu0 0
        %2028 = vmatprep.subr.bf16.mxu0 0
        %2029 = vmatpush2.bf16.msra.mxu0 0
        %2030 = vmatprep.subr.bf16.mxu0 0
        %2031 = vmatpush2.bf16.msra.mxu0 0
        %2032 = vmatprep.subr.bf16.mxu0 0
        %2033 = vmatpush2.bf16.msra.mxu0 0
        %2034 = vmatprep.subr.bf16.mxu0 0
        %2035 = vmatpush2.bf16.msra.mxu0 0
        %2036 = vmatprep.subr.bf16.mxu0 0
        %2037 = vmatpush2.bf16.msra.mxu0 0
        %2038 = vmatprep.subr.bf16.mxu0 0
        %2039 = vmatpush2.bf16.msra.mxu0 0
        %2040 = vmatprep.mubr.bf16.mxu0 0
        %2041 = vmatmul.mubr.bf16.gmra.mxu0 %v2006
        %v2042 = vpop.f32.mrf.mxu0
        %v2043 = vadd.f32 %v1978, %v2042
        %v2044 = vpop.f32.mrf.mxu0
        %v2045 = vpop.f32.mrf.mxu0
        %v2046 = vpop.f32.mrf.mxu0
        %2047 = vdwg.mxu0
        %v2048 = vadd.f32 %v2043, %v1863
        %2049 = vst.msk [vmem:[%s635] sm:$0xff] %vm1819, %v2048
        %s2050 = sand.u32 %s404, 1
        %s2051 = scalar_lea.sflag [#allocation7], %s2050
        %s2052 = sand.u32 %s404, 1
        %s2053 = smul.addr %s2052, 8
        %s2054 = scalar_lea.vmem [#allocation17], %s2053
        // Predicated region
        $region117: #{tpu_custom_call.1} parent=83 // pred_check
          %p2055 = pneg %p414
        $region118: #{tpu_custom_call.1} parent=83 // pred_check_branch
          %2057 = sbr.rel (%p2055) target = $region120
        $region119: #{tpu_custom_call.1} parent=83 // pred_region
          %s2059 = ssub.s32 128, 128
          %2060 = vsyncadd %s2051, %s2059
          %s2061 = sadd.s32 %s41, %s40
          %s2062 = smul.addr %s2061, 128
          %s2063 = scalar_lea.hbm %s16, %s2062
          %s2065 = sshll.u32 %s2054, 4
          %s2066 = int_to_ptr.vmem [resolvable:$true] %s2065
          %2068 = dma.vmem_to_hbm [thread:$0]  %s2066, 128, %s2063, %s2051
        $region120: #{tpu_custom_call.1} parent=83 // pred_fallthru
          _
      $region84: #{tpu_custom_call.1} parent=5 // pred_fallthru
        _
      %p2069 = scmp.le.s32.totalorder 2, %s31
      // Predicated region
      $region121: #{tpu_custom_call.1} parent=5 // pred_check
        %p2070 = pneg %p2069
      $region122: #{tpu_custom_call.1} parent=5 // pred_check_branch
        %2072 = sbr.rel (%p2070) target = $region124
      $region123: #{tpu_custom_call.1} parent=5 // pred_region
        %s2073 = ssub.s32 %s31, 2
        // Predicated region
        $region125: #{tpu_custom_call.1} parent=123 // pred_check
          %p2074 = pneg %p420
        $region126: #{tpu_custom_call.1} parent=123 // pred_check_branch
          %2076 = sbr.rel (%p2074) target = $region128
        $region127: #{tpu_custom_call.1} parent=123 // pred_region
          %s2077 = sand.u32 %s405, 1
          %s2078 = scalar_lea.sflag [#allocation7], %s2077
          %s2079 = sand.u32 %s405, 1
          %s2080 = smul.addr %s2079, 8
          %s2081 = scalar_lea.vmem [#allocation17], %s2080
          %2082 = dma.done %s2078, 128
        $region128: #{tpu_custom_call.1} parent=123 // pred_fallthru
          _
      $region124: #{tpu_custom_call.1} parent=5 // pred_fallthru
        _
    $region6: #{tpu_custom_call.1} parent=1 // loop_footer
      %s35 = sadd.s32 1, %s31
    $region7: #{tpu_custom_call.1} parent=1 // loop_footer_branch
      %30 = sbr.rel target = $region3
    $region8: #{tpu_custom_call.1} parent=1 // loop_exit
      _
    %2083 = vsyncpa [#allocation6], 1
    %s2084 = scalar_lea.sflag [#allocation6], 1
    %2085 = vsyncpa %s2084, 1
    %2086 = vsyncpa [#allocation9], 1
    %2087 = vsyncpa [#allocation12], 1
    %2088 = vsyncpa [#allocation15], 1
    %2089 = vsyncpa [#allocation7], 1
    %s2090 = scalar_lea.sflag [#allocation7], 1
    %2091 = vsyncpa %s2090, 1

</llo_original>
